<compile_context>
chip_gen: v7x
topology: tpu7x:2x2x1
jax: 0.10.0
libtpu: 0.0.40
codegen_flags: <defaults>
</compile_context>

<pallas_src>
import functools

import jax
import jax.numpy as jnp
from jax import lax
from jax.experimental import pallas as pl
from jax.experimental.pallas import tpu as pltpu

EPS = 1e-5
KSIZE = 3


# ---------------------------------------------------------------------------
# Fused kernel: conv (3 big-K MXU matmuls, images stacked) + BN stats +
# scale/shift + normalize + ReLU, all in one invocation.
# ---------------------------------------------------------------------------
def _fused_kernel(x_ref, w_ref, gamma_ref, beta_ref, o_ref, *, N, H, W, Cout):
    # x_ref:     (N, H+2, Kpad)      bf16 lane-dense padded input
    # w_ref:     (3, Kpad, W*Cout)   bf16 banded conv weight (kw folded into K)
    # gamma_ref: (1, Cout)           f32
    # beta_ref:  (1, Cout)           f32
    # o_ref:     (N*H, W*Cout)       f32
    Kpad = x_ref.shape[2]
    WC = W * Cout
    M = N * H
    inv_count = 1.0 / float(N * H * W)

    # ---- conv: 3 MXU matmuls (one per kh tap), all images stacked (M=N*H) ----
    acc = jnp.zeros((M, WC), dtype=jnp.float32)
    for kh in range(KSIZE):
        lhs = x_ref[:, pl.ds(kh, H), :].reshape(M, Kpad)       # (N*H, Kpad) bf16
        acc = acc + jnp.dot(lhs, w_ref[kh],
                            preferred_element_type=jnp.float32)

    # ---- BN batch statistics, one pass while acc is live ----
    row_sum = jnp.sum(acc, axis=0, keepdims=True)              # (1, WC)
    row_sq = jnp.sum(acc * acc, axis=0, keepdims=True)         # (1, WC)
    stats = jnp.concatenate([row_sum, row_sq], axis=0)         # (2, WC)

    # lane (w*Cout+co) -> channel (co) reduce via one-hot MXU matmul
    lane_ch = lax.broadcasted_iota(jnp.int32, (WC, Cout), 0) % Cout
    ch_id = lax.broadcasted_iota(jnp.int32, (WC, Cout), 1)
    onehot_wc = (lane_ch == ch_id).astype(jnp.float32)         # (WC, Cout)
    ch_stats = jnp.dot(stats, onehot_wc,
                       preferred_element_type=jnp.float32)     # (2, Cout)

    mean = ch_stats[0:1, :] * inv_count                        # (1, Cout)
    ex2 = ch_stats[1:2, :] * inv_count
    var = jnp.maximum(ex2 - mean * mean, 0.0)   # clamp one-pass cancellation
    scale_c = gamma_ref[...] * lax.rsqrt(var + EPS)            # (1, Cout)  EUP
    shift_c = beta_ref[...] - mean * scale_c                   # (1, Cout)

    # channel -> lane broadcast via one-hot MXU matmul
    ss = jnp.concatenate([scale_c, shift_c], axis=0)           # (2, Cout)
    lane_ch2 = lax.broadcasted_iota(jnp.int32, (Cout, WC), 1) % Cout
    ch_id2 = lax.broadcasted_iota(jnp.int32, (Cout, WC), 0)
    onehot_cw = (lane_ch2 == ch_id2).astype(jnp.float32)       # (Cout, WC)
    ss_lane = jnp.dot(ss, onehot_cw,
                      preferred_element_type=jnp.float32)      # (2, WC)

    # ---- normalize + ReLU, lane-dense unmasked store ----
    y = acc * ss_lane[0:1, :] + ss_lane[1:2, :]
    o_ref[...] = jnp.maximum(y, 0.0).astype(o_ref.dtype)


# ---------------------------------------------------------------------------
# Wrapper
# ---------------------------------------------------------------------------
def _build_banded_weights(w_oihw, W):
    """OIHW conv weight -> (KH, (W+KW-1)*Cin, W*Cout) banded matmul weights."""
    Cout, Cin, KH, KW = w_oihw.shape
    Wp = W + KW - 1
    w_hwio = jnp.transpose(w_oihw, (2, 3, 1, 0))            # (KH, KW, Cin, Cout)
    wp_idx = jnp.arange(Wp)[:, None, None]
    w_idx = jnp.arange(W)[None, :, None]
    kw_idx = jnp.arange(KW)[None, None, :]
    mask = (wp_idx == w_idx + kw_idx).astype(w_hwio.dtype)   # (Wp, W, KW)
    # bigw[kh, wp*Cin+ci, w*Cout+co] = w_hwio[kh, wp-w, ci, co] if 0<=wp-w<KW
    bigw = jnp.einsum('pwk,hkio->hpiwo', mask, w_hwio)
    return bigw.reshape(KH, Wp * Cin, W * Cout)


@jax.jit
def residual_block_forward(x_nchw, w_oihw, gamma, beta):
    """x_nchw: (N, Cin, H, W) f32. Returns (N, Cout, H, W) f32."""
    N, Cin, H, W = x_nchw.shape
    Cout = w_oihw.shape[0]
    Hp, Wp = H + 2, W + 2
    WC = W * Cout
    K0 = Wp * Cin
    Kpad = ((K0 + 127) // 128) * 128        # 288 -> 384: unmasked K tiling

    # NCHW -> padded lane-dense (N, H+2, Kpad), bf16 MXU operands.
    x_nhwc = jnp.transpose(x_nchw, (0, 2, 3, 1))
    x_pad = jnp.pad(x_nhwc, ((0, 0), (1, 1), (1, 1), (0, 0)))
    x_lane = x_pad.reshape(N, Hp, K0)
    x_lane = jnp.pad(x_lane, ((0, 0), (0, 0), (0, Kpad - K0)))
    x_lane = x_lane.astype(jnp.bfloat16)

    bigw = _build_banded_weights(w_oihw, W)                  # (3, K0, WC) f32
    bigw = jnp.pad(bigw, ((0, 0), (0, Kpad - K0), (0, 0)))
    bigw = bigw.astype(jnp.bfloat16)                         # (3, Kpad, WC)

    gamma2 = gamma.reshape(1, Cout).astype(jnp.float32)
    beta2 = beta.reshape(1, Cout).astype(jnp.float32)

    kernel = functools.partial(_fused_kernel, N=N, H=H, W=W, Cout=Cout)
    out_lane = pl.pallas_call(
        kernel,
        grid=(1,),   # fully fused single step: the whole problem fits VMEM
        out_shape=jax.ShapeDtypeStruct((N * H, WC), jnp.float32),
        in_specs=[
            pl.BlockSpec((N, Hp, Kpad), lambda i: (0, 0, 0)),
            pl.BlockSpec((KSIZE, Kpad, WC), lambda i: (0, 0, 0)),
            pl.BlockSpec((1, Cout), lambda i: (0, 0)),
            pl.BlockSpec((1, Cout), lambda i: (0, 0)),
        ],
        out_specs=pl.BlockSpec((N * H, WC), lambda i: (0, 0)),
        compiler_params=pltpu.CompilerParams(
            dimension_semantics=("arbitrary",)),
    )(x_lane, bigw, gamma2, beta2)

    # lane-dense (N*H, W*Cout) -> NCHW (module output contract).
    out_nhwc = out_lane.reshape(N, H, W, Cout)
    return jnp.transpose(out_nhwc, (0, 3, 1, 2))


# ---------------------------------------------------------------------------
# Pure-JAX reference
# ---------------------------------------------------------------------------
def _reference(x_nchw, w_oihw, gamma, beta):
    conv = lax.conv_general_dilated(
        x_nchw, w_oihw, window_strides=(1, 1), padding=[(1, 1), (1, 1)],
        dimension_numbers=("NCHW", "OIHW", "NCHW"))
    mean = conv.mean(axis=(0, 2, 3), keepdims=True)
    var = ((conv - mean) ** 2).mean(axis=(0, 2, 3), keepdims=True)
    norm = (conv - mean) / jnp.sqrt(var + EPS)
    y = norm * gamma.reshape(1, -1, 1, 1) + beta.reshape(1, -1, 1, 1)
    return jnp.maximum(y, 0.0)


if __name__ == "__main__":
    # Module defaults: in_channels = out_channels = 16.
    N, Cin, Cout, H, W = 2, 16, 16, 16, 16

    key = jax.random.PRNGKey(0)
    kx, kw = jax.random.split(key)
    x = jax.random.normal(kx, (N, Cin, H, W), dtype=jnp.float32)
    # Deterministic synthetic conv weight (bias=False in the module).
    w = jax.random.normal(kw, (Cout, Cin, KSIZE, KSIZE), dtype=jnp.float32) * 0.1
    # BatchNorm2d default parameter init: weight=1, bias=0.
    gamma = jnp.ones((Cout,), dtype=jnp.float32)
    beta = jnp.zeros((Cout,), dtype=jnp.float32)

    out = jax.block_until_ready(residual_block_forward(x, w, gamma, beta))

    ref = _reference(x, w, gamma, beta)
    # bf16 MXU operands with f32 accumulation: tolerance reflects bf16 rounding
    # of the K=288 conv reduction (typical max-abs error ~1e-2 at these scales).
    err = float(jnp.max(jnp.abs(out - ref)))
    assert err < 5e-2, f"max abs error {err}"
    print("KERNEL_OK")
</pallas_src>

<mosaic_0001>
module attributes {stable_mosaic.version = 11 : i64} {
  func.func @_fused_kernel(%arg0: i32, %arg1: memref<2x18x384xbf16, #tpu.memory_space<vmem>>, %arg2: memref<3x384x256xbf16, #tpu.memory_space<vmem>>, %arg3: memref<1x16xf32, #tpu.memory_space<vmem>>, %arg4: memref<1x16xf32, #tpu.memory_space<vmem>>, %arg5: memref<32x256xf32, #tpu.memory_space<vmem>>) attributes {dimension_semantics = [#tpu.dimension_semantics<arbitrary>], iteration_bounds = array<i64: 1>, scalar_prefetch = 0 : i64, scratch_operands = 0 : i64, tpu.core_type = #tpu.core_type<tc>, window_params = [{pipeline_mode = #tpu.pipeline_mode<synchronous>, transform_indices = @transform_0, window_bounds = array<i64: 2, 18, 384>}, {pipeline_mode = #tpu.pipeline_mode<synchronous>, transform_indices = @transform_1, window_bounds = array<i64: 3, 384, 256>}, {pipeline_mode = #tpu.pipeline_mode<synchronous>, transform_indices = @transform_2, window_bounds = array<i64: 1, 16>}, {pipeline_mode = #tpu.pipeline_mode<synchronous>, transform_indices = @transform_3, window_bounds = array<i64: 1, 16>}, {pipeline_mode = #tpu.pipeline_mode<synchronous>, transform_indices = @transform_4, window_bounds = array<i64: 32, 256>}]} {
    %cst = arith.constant 0.000000e+00 : f32
    %0 = vector.broadcast %cst : f32 to vector<32x256xf32>
    %c0 = arith.constant 0 : index
    %c0_0 = arith.constant 0 : index
    %c0_1 = arith.constant 0 : index
    %1 = vector.load %arg1[%c0, %c0_0, %c0_1] : memref<2x18x384xbf16, #tpu.memory_space<vmem>>, vector<2x16x384xbf16>
    %2 = vector.shape_cast %1 : vector<2x16x384xbf16> to vector<32x384xbf16>
    %c0_2 = arith.constant 0 : index
    %c0_3 = arith.constant 0 : index
    %c0_4 = arith.constant 0 : index
    %3 = vector.load %arg2[%c0_2, %c0_3, %c0_4] : memref<3x384x256xbf16, #tpu.memory_space<vmem>>, vector<1x384x256xbf16>
    %4 = vector.shape_cast %3 : vector<1x384x256xbf16> to vector<384x256xbf16>
    %cst_5 = arith.constant dense<0.000000e+00> : vector<32x256xf32>
    %5 = tpu.matmul %2, %4, %cst_5 {dimension_numbers = #tpu.dot_dimension_numbers<[1], [0], [0], [1], [0, 0, 1, 1], [], []>} : vector<32x384xbf16>, vector<384x256xbf16>, vector<32x256xf32> -> vector<32x256xf32>
    %6 = arith.addf %0, %5 : vector<32x256xf32>
    %c0_6 = arith.constant 0 : index
    %c1 = arith.constant 1 : index
    %c0_7 = arith.constant 0 : index
    %7 = vector.load %arg1[%c0_6, %c1, %c0_7] : memref<2x18x384xbf16, #tpu.memory_space<vmem>>, vector<2x16x384xbf16>
    %8 = vector.shape_cast %7 : vector<2x16x384xbf16> to vector<32x384xbf16>
    %c1_8 = arith.constant 1 : index
    %c0_9 = arith.constant 0 : index
    %c0_10 = arith.constant 0 : index
    %9 = vector.load %arg2[%c1_8, %c0_9, %c0_10] : memref<3x384x256xbf16, #tpu.memory_space<vmem>>, vector<1x384x256xbf16>
    %10 = vector.shape_cast %9 : vector<1x384x256xbf16> to vector<384x256xbf16>
    %cst_11 = arith.constant dense<0.000000e+00> : vector<32x256xf32>
    %11 = tpu.matmul %8, %10, %cst_11 {dimension_numbers = #tpu.dot_dimension_numbers<[1], [0], [0], [1], [0, 0, 1, 1], [], []>} : vector<32x384xbf16>, vector<384x256xbf16>, vector<32x256xf32> -> vector<32x256xf32>
    %12 = arith.addf %6, %11 : vector<32x256xf32>
    %c0_12 = arith.constant 0 : index
    %c2 = arith.constant 2 : index
    %c0_13 = arith.constant 0 : index
    %13 = vector.load %arg1[%c0_12, %c2, %c0_13] : memref<2x18x384xbf16, #tpu.memory_space<vmem>>, vector<2x16x384xbf16>
    %14 = vector.shape_cast %13 : vector<2x16x384xbf16> to vector<32x384xbf16>
    %c2_14 = arith.constant 2 : index
    %c0_15 = arith.constant 0 : index
    %c0_16 = arith.constant 0 : index
    %15 = vector.load %arg2[%c2_14, %c0_15, %c0_16] : memref<3x384x256xbf16, #tpu.memory_space<vmem>>, vector<1x384x256xbf16>
    %16 = vector.shape_cast %15 : vector<1x384x256xbf16> to vector<384x256xbf16>
    %cst_17 = arith.constant dense<0.000000e+00> : vector<32x256xf32>
    %17 = tpu.matmul %14, %16, %cst_17 {dimension_numbers = #tpu.dot_dimension_numbers<[1], [0], [0], [1], [0, 0, 1, 1], [], []>} : vector<32x384xbf16>, vector<384x256xbf16>, vector<32x256xf32> -> vector<32x256xf32>
    %18 = arith.addf %12, %17 : vector<32x256xf32>
    %cst_18 = arith.constant dense<0.000000e+00> : vector<256xf32>
    %19 = vector.multi_reduction <add>, %18, %cst_18 [0] : vector<32x256xf32> to vector<256xf32>
    %20 = vector.shape_cast %19 : vector<256xf32> to vector<1x256xf32>
    %21 = arith.mulf %18, %18 : vector<32x256xf32>
    %cst_19 = arith.constant dense<0.000000e+00> : vector<256xf32>
    %22 = vector.multi_reduction <add>, %21, %cst_19 [0] : vector<32x256xf32> to vector<256xf32>
    %23 = vector.shape_cast %22 : vector<256xf32> to vector<1x256xf32>
    %24 = tpu.concatenate %20, %23 in 0 : vector<1x256xf32>, vector<1x256xf32> -> vector<2x256xf32>
    %25 = tpu.iota {dimensions = array<i32: 0>} : vector<256x16xi32>
    %c16_i32 = arith.constant 16 : i32
    %c0_i32 = arith.constant 0 : i32
    %26 = arith.cmpi eq, %c16_i32, %c0_i32 : i32
    %c1_i32 = arith.constant 1 : i32
    %27 = arith.select %26, %c1_i32, %c16_i32 : i32
    %28 = vector.broadcast %27 : i32 to vector<256x16xi32>
    %29 = arith.remsi %25, %28 : vector<256x16xi32>
    %c0_i32_20 = arith.constant 0 : i32
    %30 = vector.broadcast %c0_i32_20 : i32 to vector<256x16xi32>
    %31 = arith.cmpi ne, %29, %30 : vector<256x16xi32>
    %c0_i32_21 = arith.constant 0 : i32
    %32 = vector.broadcast %c0_i32_21 : i32 to vector<256x16xi32>
    %33 = arith.cmpi slt, %29, %32 : vector<256x16xi32>
    %c0_i32_22 = arith.constant 0 : i32
    %34 = arith.cmpi slt, %27, %c0_i32_22 : i32
    %35 = vector.broadcast %34 : i1 to vector<256x16xi1>
    %36 = vector.broadcast %35 : vector<256x16xi1> to vector<256x16xi1>
    %37 = arith.xori %33, %36 : vector<256x16xi1>
    %38 = arith.andi %37, %31 : vector<256x16xi1>
    %39 = vector.broadcast %27 : i32 to vector<256x16xi32>
    %40 = arith.addi %29, %39 : vector<256x16xi32>
    %41 = arith.select %38, %40, %29 : vector<256x16xi1>, vector<256x16xi32>
    %42 = tpu.iota {dimensions = array<i32: 1>} : vector<256x16xi32>
    %43 = arith.cmpi eq, %41, %42 : vector<256x16xi32>
    %44 = arith.extui %43 : vector<256x16xi1> to vector<256x16xi32>
    %45 = arith.sitofp %44 : vector<256x16xi32> to vector<256x16xf32>
    %cst_23 = arith.constant dense<0.000000e+00> : vector<2x16xf32>
    %46 = tpu.matmul %24, %45, %cst_23 {dimension_numbers = #tpu.dot_dimension_numbers<[1], [0], [0], [1], [0, 0, 1, 1], [], []>} : vector<2x256xf32>, vector<256x16xf32>, vector<2x16xf32> -> vector<2x16xf32>
    %47 = vector.extract_strided_slice %46 {offsets = [0, 0], sizes = [1, 16], strides = [1, 1]} : vector<2x16xf32> to vector<1x16xf32>
    %cst_24 = arith.constant 0.001953125 : f32
    %48 = vector.broadcast %cst_24 : f32 to vector<1x16xf32>
    %49 = arith.mulf %47, %48 : vector<1x16xf32>
    %50 = vector.extract_strided_slice %46 {offsets = [1, 0], sizes = [1, 16], strides = [1, 1]} : vector<2x16xf32> to vector<1x16xf32>
    %cst_25 = arith.constant 0.001953125 : f32
    %51 = vector.broadcast %cst_25 : f32 to vector<1x16xf32>
    %52 = arith.mulf %50, %51 : vector<1x16xf32>
    %53 = arith.mulf %49, %49 : vector<1x16xf32>
    %54 = arith.subf %52, %53 : vector<1x16xf32>
    %cst_26 = arith.constant 0.000000e+00 : f32
    %55 = vector.broadcast %cst_26 : f32 to vector<1x16xf32>
    %56 = arith.maximumf %54, %55 : vector<1x16xf32>
    %c0_27 = arith.constant 0 : index
    %c0_28 = arith.constant 0 : index
    %57 = vector.load %arg3[%c0_27, %c0_28] : memref<1x16xf32, #tpu.memory_space<vmem>>, vector<1x16xf32>
    %cst_29 = arith.constant 9.99999974E-6 : f32
    %58 = vector.broadcast %cst_29 : f32 to vector<1x16xf32>
    %59 = arith.addf %56, %58 : vector<1x16xf32>
    %60 = math.rsqrt %59 : vector<1x16xf32>
    %61 = arith.mulf %57, %60 : vector<1x16xf32>
    %c0_30 = arith.constant 0 : index
    %c0_31 = arith.constant 0 : index
    %62 = vector.load %arg4[%c0_30, %c0_31] : memref<1x16xf32, #tpu.memory_space<vmem>>, vector<1x16xf32>
    %63 = arith.mulf %49, %61 : vector<1x16xf32>
    %64 = arith.subf %62, %63 : vector<1x16xf32>
    %65 = tpu.concatenate %61, %64 in 0 : vector<1x16xf32>, vector<1x16xf32> -> vector<2x16xf32>
    %66 = tpu.iota {dimensions = array<i32: 1>} : vector<16x256xi32>
    %c16_i32_32 = arith.constant 16 : i32
    %c0_i32_33 = arith.constant 0 : i32
    %67 = arith.cmpi eq, %c16_i32_32, %c0_i32_33 : i32
    %c1_i32_34 = arith.constant 1 : i32
    %68 = arith.select %67, %c1_i32_34, %c16_i32_32 : i32
    %69 = vector.broadcast %68 : i32 to vector<16x256xi32>
    %70 = arith.remsi %66, %69 : vector<16x256xi32>
    %c0_i32_35 = arith.constant 0 : i32
    %71 = vector.broadcast %c0_i32_35 : i32 to vector<16x256xi32>
    %72 = arith.cmpi ne, %70, %71 : vector<16x256xi32>
    %c0_i32_36 = arith.constant 0 : i32
    %73 = vector.broadcast %c0_i32_36 : i32 to vector<16x256xi32>
    %74 = arith.cmpi slt, %70, %73 : vector<16x256xi32>
    %c0_i32_37 = arith.constant 0 : i32
    %75 = arith.cmpi slt, %68, %c0_i32_37 : i32
    %76 = vector.broadcast %75 : i1 to vector<16x256xi1>
    %77 = vector.broadcast %76 : vector<16x256xi1> to vector<16x256xi1>
    %78 = arith.xori %74, %77 : vector<16x256xi1>
    %79 = arith.andi %78, %72 : vector<16x256xi1>
    %80 = vector.broadcast %68 : i32 to vector<16x256xi32>
    %81 = arith.addi %70, %80 : vector<16x256xi32>
    %82 = arith.select %79, %81, %70 : vector<16x256xi1>, vector<16x256xi32>
    %83 = tpu.iota {dimensions = array<i32: 0>} : vector<16x256xi32>
    %84 = arith.cmpi eq, %82, %83 : vector<16x256xi32>
    %85 = arith.extui %84 : vector<16x256xi1> to vector<16x256xi32>
    %86 = arith.sitofp %85 : vector<16x256xi32> to vector<16x256xf32>
    %cst_38 = arith.constant dense<0.000000e+00> : vector<2x256xf32>
    %87 = tpu.matmul %65, %86, %cst_38 {dimension_numbers = #tpu.dot_dimension_numbers<[1], [0], [0], [1], [0, 0, 1, 1], [], []>} : vector<2x16xf32>, vector<16x256xf32>, vector<2x256xf32> -> vector<2x256xf32>
    %88 = vector.extract_strided_slice %87 {offsets = [0, 0], sizes = [1, 256], strides = [1, 1]} : vector<2x256xf32> to vector<1x256xf32>
    %89 = vector.broadcast %88 : vector<1x256xf32> to vector<32x256xf32>
    %90 = arith.mulf %18, %89 : vector<32x256xf32>
    %91 = vector.extract_strided_slice %87 {offsets = [1, 0], sizes = [1, 256], strides = [1, 1]} : vector<2x256xf32> to vector<1x256xf32>
    %92 = vector.broadcast %91 : vector<1x256xf32> to vector<32x256xf32>
    %93 = arith.addf %90, %92 : vector<32x256xf32>
    %cst_39 = arith.constant 0.000000e+00 : f32
    %94 = vector.broadcast %cst_39 : f32 to vector<32x256xf32>
    %95 = arith.maximumf %93, %94 : vector<32x256xf32>
    %c0_40 = arith.constant 0 : index
    %c0_41 = arith.constant 0 : index
    %96 = vector.load %arg5[%c0_40, %c0_41] : memref<32x256xf32, #tpu.memory_space<vmem>>, vector<32x256xf32>
    tpu.vector_store %arg5[%c0_40, %c0_41], %95 {strides = array<i32>} : memref<32x256xf32, #tpu.memory_space<vmem>>, vector<32x256xf32>,
    return
  }
  func.func @transform_0(%arg0: i32) -> (i32, i32, i32) {
    %c0_i32 = arith.constant 0 : i32
    %c0_i32_0 = arith.constant 0 : i32
    %c0_i32_1 = arith.constant 0 : i32
    %c0_i32_2 = arith.constant 0 : i32
    return %c0_i32, %c0_i32_0, %c0_i32_1 : i32, i32, i32
  }
  func.func @transform_1(%arg0: i32) -> (i32, i32, i32) {
    %c0_i32 = arith.constant 0 : i32
    %c0_i32_0 = arith.constant 0 : i32
    %c0_i32_1 = arith.constant 0 : i32
    %c0_i32_2 = arith.constant 0 : i32
    return %c0_i32, %c0_i32_0, %c0_i32_1 : i32, i32, i32
  }
  func.func @transform_2(%arg0: i32) -> (i32, i32) {
    %c0_i32 = arith.constant 0 : i32
    %c0_i32_0 = arith.constant 0 : i32
    %c0_i32_1 = arith.constant 0 : i32
    return %c0_i32, %c0_i32_0 : i32, i32
  }
  func.func @transform_3(%arg0: i32) -> (i32, i32) {
    %c0_i32 = arith.constant 0 : i32
    %c0_i32_0 = arith.constant 0 : i32
    %c0_i32_1 = arith.constant 0 : i32
    return %c0_i32, %c0_i32_0 : i32, i32
  }
  func.func @transform_4(%arg0: i32) -> (i32, i32) {
    %c0_i32 = arith.constant 0 : i32
    %c0_i32_0 = arith.constant 0 : i32
    %c0_i32_1 = arith.constant 0 : i32
    return %c0_i32, %c0_i32_0 : i32, i32
  }
}

</mosaic_0001>

<llo_original>
// kernel: residual_block_forward.1
$region0: #{residual_block_forward.1}
  #allocation0 [shape = 'u32[]', space=smem, size = 0x4, offset = 0x4, fixed_abs, tag = 'smem constant byte address 0x4 - core index']
  #allocation1 [shape = 'u32[144,128]{1,0:T(1,128)}', space=vmem, size = 0x12000, scoped, tag = 'internal scratch']
  %s0 = inlined_call_operand.vmem [shape: bf16[2,18,384], index: 0, kind: input, shape index: {}]
  %s1 = inlined_call_operand.vmem [shape: bf16[3,384,256], index: 1, kind: input, shape index: {}]
  %s2 = inlined_call_operand.vmem [shape: f32[1,16], index: 2, kind: input, shape index: {}]
  %s3 = inlined_call_operand.vmem [shape: f32[1,16], index: 3, kind: input, shape index: {}]
  %s4 = inlined_call_operand.vmem [shape: f32[32,256], index: 4, kind: output, shape index: {}]
  %s5 = sld [smem:[#allocation0]]
  $region26: #{residual_block_forward.1} parent=0
    _
  %s7 = ssub.s32 1, %s5
  %s8 = scalar_select 0, %s7, %s5
  // Predicated region
  $region2: #{residual_block_forward.1} parent=0 // pred_check
    _
  $region3: #{residual_block_forward.1} parent=0 // pred_check_branch
    %10 = sbr.rel (0) target = $region5
  $region4: #{residual_block_forward.1} parent=0 // pred_region
    _
  $region5: #{residual_block_forward.1} parent=0 // pred_fallthru
    _
  // Predicated region
  $region6: #{residual_block_forward.1} parent=0 // pred_check
    _
  $region7: #{residual_block_forward.1} parent=0 // pred_check_branch
    %12 = sbr.rel (0) target = $region9
  $region8: #{residual_block_forward.1} parent=0 // pred_region
    _
  $region9: #{residual_block_forward.1} parent=0 // pred_fallthru
    _
  // Predicated region
  $region10: #{residual_block_forward.1} parent=0 // pred_check
    _
  $region11: #{residual_block_forward.1} parent=0 // pred_check_branch
    %14 = sbr.rel (0) target = $region13
  $region12: #{residual_block_forward.1} parent=0 // pred_region
    _
  $region13: #{residual_block_forward.1} parent=0 // pred_fallthru
    _
  // Predicated region
  $region14: #{residual_block_forward.1} parent=0 // pred_check
    _
  $region15: #{residual_block_forward.1} parent=0 // pred_check_branch
    %16 = sbr.rel (0) target = $region17
  $region16: #{residual_block_forward.1} parent=0 // pred_region
    _
  $region17: #{residual_block_forward.1} parent=0 // pred_fallthru
    _
  %v18 = vld [vmem:[%s0] sm:$0xff]
  %v19 = vld [vmem:[%s0 + $0x8] sm:$0xf]
  %v20 = vld [vmem:[%s0 + $0xc] sm:$0xff]
  %v21 = vld [vmem:[%s0 + $0x14] sm:$0xf]
  %v22 = vld [vmem:[%s0 + $0x24] sm:$0xff]
  %v23 = vld [vmem:[%s0 + $0x2c] sm:$0xf]
  %v24 = vld [vmem:[%s0 + $0x30] sm:$0xff]
  %v25 = vld [vmem:[%s0 + $0x38] sm:$0xf]
  %v26 = vld [vmem:[%s1] sm:$0xff]
  %v27 = vld [vmem:[%s1 + $0x8] sm:$0xff]
  %v28 = vld [vmem:[%s1 + $0x10] sm:$0xff]
  %v29 = vld [vmem:[%s1 + $0x18] sm:$0xff]
  %v30 = vld [vmem:[%s1 + $0x20] sm:$0xff]
  %v31 = vld [vmem:[%s1 + $0x28] sm:$0xff]
  %v32 = vld [vmem:[%s1 + $0x30] sm:$0xff]
  %v33 = vld [vmem:[%s1 + $0x38] sm:$0xff]
  %v34 = vld [vmem:[%s1 + $0x40] sm:$0xff]
  %v35 = vld [vmem:[%s1 + $0x48] sm:$0xff]
  %v36 = vld [vmem:[%s1 + $0x50] sm:$0xff]
  %v37 = vld [vmem:[%s1 + $0x58] sm:$0xff]
  %v38 = vld [vmem:[%s1 + $0x60] sm:$0xff]
  %v39 = vld [vmem:[%s1 + $0x68] sm:$0xff]
  %v40 = vld [vmem:[%s1 + $0x70] sm:$0xff]
  %v41 = vld [vmem:[%s1 + $0x78] sm:$0xff]
  %v42 = vld [vmem:[%s1 + $0x80] sm:$0xff]
  %v43 = vld [vmem:[%s1 + $0x88] sm:$0xff]
  %v44 = vld [vmem:[%s1 + $0x90] sm:$0xff]
  %v45 = vld [vmem:[%s1 + $0x98] sm:$0xff]
  %v46 = vld [vmem:[%s1 + $0xa0] sm:$0xff]
  %v47 = vld [vmem:[%s1 + $0xa8] sm:$0xff]
  %v48 = vld [vmem:[%s1 + $0xb0] sm:$0xff]
  %v49 = vld [vmem:[%s1 + $0xb8] sm:$0xff]
  %v50 = vld [vmem:[%s1 + $0xc0] sm:$0xff]
  %v51 = vld [vmem:[%s1 + $0xc8] sm:$0xff]
  %v52 = vld [vmem:[%s1 + $0xd0] sm:$0xff]
  %v53 = vld [vmem:[%s1 + $0xd8] sm:$0xff]
  %v54 = vld [vmem:[%s1 + $0xe0] sm:$0xff]
  %v55 = vld [vmem:[%s1 + $0xe8] sm:$0xff]
  %v56 = vld [vmem:[%s1 + $0xf0] sm:$0xff]
  %v57 = vld [vmem:[%s1 + $0xf8] sm:$0xff]
  %v58 = vld [vmem:[%s1 + $0x100] sm:$0xff]
  %v59 = vld [vmem:[%s1 + $0x108] sm:$0xff]
  %v60 = vld [vmem:[%s1 + $0x110] sm:$0xff]
  %v61 = vld [vmem:[%s1 + $0x118] sm:$0xff]
  %v62 = vld [vmem:[%s1 + $0x120] sm:$0xff]
  %v63 = vld [vmem:[%s1 + $0x128] sm:$0xff]
  %v64 = vld [vmem:[%s1 + $0x130] sm:$0xff]
  %v65 = vld [vmem:[%s1 + $0x138] sm:$0xff]
  %v66 = vld [vmem:[%s1 + $0x140] sm:$0xff]
  %v67 = vld [vmem:[%s1 + $0x148] sm:$0xff]
  %v68 = vld [vmem:[%s1 + $0x150] sm:$0xff]
  %v69 = vld [vmem:[%s1 + $0x158] sm:$0xff]
  %v70 = vld [vmem:[%s1 + $0x160] sm:$0xff]
  %v71 = vld [vmem:[%s1 + $0x168] sm:$0xff]
  %v72 = vld [vmem:[%s1 + $0x170] sm:$0xff]
  %v73 = vld [vmem:[%s1 + $0x178] sm:$0xff]
  %v74 = vld [vmem:[%s0 + $0x18] sm:$0x11]
  %v75 = vld [vmem:[%s0 + $0x20] sm:$0x1]
  %v76 = vld [vmem:[%s0 + $0x3c] sm:$0x11]
  %v77 = vld [vmem:[%s0 + $0x44] sm:$0x1]
  %vm78 = vsmask.f32 3328
  %vm79 = vsmask.f32 7440
  %vm80 = vmor %vm78, %vm79
  %v82 = vshrl.u32 %v18, 16
  %v84 = vrot.slane %v82, 4
  %v85 = vshll.u32 %v18, 16
  %v87 = vrot.slane %v85, 5
  %v88 = vor.u32 %v84, %v87
  %v89 = vrot.slane %v88, 4
  %v91 = vshll.u32 %v20, 16
  %v93 = vrot.slane %v91, 5
  %v94 = vsel %vm80, %v89, %v93
  %v96 = vshrl.u32 %v19, 16
  %v98 = vrot.slane %v96, 4
  %v99 = vshll.u32 %v19, 16
  %v101 = vrot.slane %v99, 5
  %v102 = vor.u32 %v98, %v101
  %v103 = vrot.slane %v102, 4
  %v105 = vshll.u32 %v21, 16
  %v107 = vrot.slane %v105, 5
  %v108 = vsel %vm80, %v103, %v107
  %v109 = vshrl.u32 %v20, 16
  %v111 = vrot.slane %v109, 4
  %v112 = vor.u32 %v111, %v93
  %v113 = vrot.slane %v112, 4
  %v115 = vshll.u32 %v74, 16
  %v117 = vrot.slane %v115, 5
  %v118 = vsel %vm80, %v113, %v117
  %v119 = vshrl.u32 %v21, 16
  %v121 = vrot.slane %v119, 4
  %v122 = vor.u32 %v121, %v107
  %v123 = vrot.slane %v122, 4
  %v125 = vshll.u32 %v75, 16
  %v127 = vrot.slane %v125, 5
  %v128 = vsel %vm80, %v123, %v127
  %v130 = vshrl.u32 %v22, 16
  %v132 = vrot.slane %v130, 4
  %v133 = vshll.u32 %v22, 16
  %v135 = vrot.slane %v133, 5
  %v136 = vor.u32 %v132, %v135
  %v137 = vrot.slane %v136, 4
  %v139 = vshll.u32 %v24, 16
  %v141 = vrot.slane %v139, 5
  %v142 = vsel %vm80, %v137, %v141
  %v144 = vshrl.u32 %v23, 16
  %v146 = vrot.slane %v144, 4
  %v147 = vshll.u32 %v23, 16
  %v149 = vrot.slane %v147, 5
  %v150 = vor.u32 %v146, %v149
  %v151 = vrot.slane %v150, 4
  %v153 = vshll.u32 %v25, 16
  %v155 = vrot.slane %v153, 5
  %v156 = vsel %vm80, %v151, %v155
  %v157 = vshrl.u32 %v24, 16
  %v159 = vrot.slane %v157, 4
  %v160 = vor.u32 %v159, %v141
  %v161 = vrot.slane %v160, 4
  %v163 = vshll.u32 %v76, 16
  %v165 = vrot.slane %v163, 5
  %v166 = vsel %vm80, %v161, %v165
  %v167 = vshrl.u32 %v25, 16
  %v169 = vrot.slane %v167, 4
  %v170 = vor.u32 %v169, %v155
  %v171 = vrot.slane %v170, 4
  %v173 = vshll.u32 %v77, 16
  %v175 = vrot.slane %v173, 5
  %v176 = vsel %vm80, %v171, %v175
  %s177 = scalar_lea.vmem %s1, 384
  %v178 = vld [vmem:[%s177] sm:$0xff]
  %v179 = vld [vmem:[%s177 + $0x8] sm:$0xff]
  %v180 = vld [vmem:[%s177 + $0x10] sm:$0xff]
  %v181 = vld [vmem:[%s177 + $0x18] sm:$0xff]
  %v182 = vld [vmem:[%s177 + $0x20] sm:$0xff]
  %v183 = vld [vmem:[%s177 + $0x28] sm:$0xff]
  %v184 = vld [vmem:[%s177 + $0x30] sm:$0xff]
  %v185 = vld [vmem:[%s177 + $0x38] sm:$0xff]
  %v186 = vld [vmem:[%s177 + $0x40] sm:$0xff]
  %v187 = vld [vmem:[%s177 + $0x48] sm:$0xff]
  %v188 = vld [vmem:[%s177 + $0x50] sm:$0xff]
  %v189 = vld [vmem:[%s177 + $0x58] sm:$0xff]
  %v190 = vld [vmem:[%s177 + $0x60] sm:$0xff]
  %v191 = vld [vmem:[%s177 + $0x68] sm:$0xff]
  %v192 = vld [vmem:[%s177 + $0x70] sm:$0xff]
  %v193 = vld [vmem:[%s177 + $0x78] sm:$0xff]
  %v194 = vld [vmem:[%s177 + $0x80] sm:$0xff]
  %v195 = vld [vmem:[%s177 + $0x88] sm:$0xff]
  %v196 = vld [vmem:[%s177 + $0x90] sm:$0xff]
  %v197 = vld [vmem:[%s177 + $0x98] sm:$0xff]
  %v198 = vld [vmem:[%s177 + $0xa0] sm:$0xff]
  %v199 = vld [vmem:[%s177 + $0xa8] sm:$0xff]
  %v200 = vld [vmem:[%s177 + $0xb0] sm:$0xff]
  %v201 = vld [vmem:[%s177 + $0xb8] sm:$0xff]
  %v202 = vld [vmem:[%s177 + $0xc0] sm:$0xff]
  %v203 = vld [vmem:[%s177 + $0xc8] sm:$0xff]
  %v204 = vld [vmem:[%s177 + $0xd0] sm:$0xff]
  %v205 = vld [vmem:[%s177 + $0xd8] sm:$0xff]
  %v206 = vld [vmem:[%s177 + $0xe0] sm:$0xff]
  %v207 = vld [vmem:[%s177 + $0xe8] sm:$0xff]
  %v208 = vld [vmem:[%s177 + $0xf0] sm:$0xff]
  %v209 = vld [vmem:[%s177 + $0xf8] sm:$0xff]
  %v210 = vld [vmem:[%s177 + $0x100] sm:$0xff]
  %v211 = vld [vmem:[%s177 + $0x108] sm:$0xff]
  %v212 = vld [vmem:[%s177 + $0x110] sm:$0xff]
  %v213 = vld [vmem:[%s177 + $0x118] sm:$0xff]
  %v214 = vld [vmem:[%s177 + $0x120] sm:$0xff]
  %v215 = vld [vmem:[%s177 + $0x128] sm:$0xff]
  %v216 = vld [vmem:[%s177 + $0x130] sm:$0xff]
  %v217 = vld [vmem:[%s177 + $0x138] sm:$0xff]
  %v218 = vld [vmem:[%s177 + $0x140] sm:$0xff]
  %v219 = vld [vmem:[%s177 + $0x148] sm:$0xff]
  %v220 = vld [vmem:[%s177 + $0x150] sm:$0xff]
  %v221 = vld [vmem:[%s177 + $0x158] sm:$0xff]
  %v222 = vld [vmem:[%s177 + $0x160] sm:$0xff]
  %v223 = vld [vmem:[%s177 + $0x168] sm:$0xff]
  %v224 = vld [vmem:[%s177 + $0x170] sm:$0xff]
  %v225 = vld [vmem:[%s177 + $0x178] sm:$0xff]
  %v226 = vunpack.c.l.b16 %v94
  %v227 = vunpack.c.h.b16 %v94
  %v228 = vunpack.c.l.b16 %v108
  %v229 = vunpack.c.l.b16 %v118
  %v230 = vunpack.c.h.b16 %v118
  %v231 = vunpack.c.l.b16 %v128
  %v232 = vunpack.c.l.b16 %v142
  %v233 = vunpack.c.h.b16 %v142
  %v234 = vunpack.c.l.b16 %v156
  %v235 = vunpack.c.l.b16 %v166
  %v236 = vunpack.c.h.b16 %v166
  %v237 = vunpack.c.l.b16 %v176
  %v238 = vpack.c.b16 %v229, %v226
  %v239 = vpack.c.b16 %v230, %v227
  %v240 = vpack.c.b16 %v231, %v228
  %v241 = vpack.c.b16 %v235, %v232
  %v242 = vpack.c.b16 %v236, %v233
  %v243 = vpack.c.b16 %v237, %v234
  %v298 = vunpack.c.l.b16 %v178
  %v299 = vunpack.c.h.b16 %v178
  %v300 = vunpack.c.l.b16 %v179
  %v301 = vunpack.c.h.b16 %v179
  %v302 = vunpack.c.l.b16 %v180
  %v303 = vunpack.c.h.b16 %v180
  %v304 = vunpack.c.l.b16 %v181
  %v305 = vunpack.c.h.b16 %v181
  %v306 = vunpack.c.l.b16 %v182
  %v307 = vunpack.c.h.b16 %v182
  %v308 = vunpack.c.l.b16 %v183
  %v309 = vunpack.c.h.b16 %v183
  %v310 = vunpack.c.l.b16 %v184
  %v311 = vunpack.c.h.b16 %v184
  %v312 = vunpack.c.l.b16 %v185
  %v313 = vunpack.c.h.b16 %v185
  %v314 = vunpack.c.l.b16 %v186
  %v315 = vunpack.c.h.b16 %v186
  %v316 = vunpack.c.l.b16 %v187
  %v317 = vunpack.c.h.b16 %v187
  %v318 = vunpack.c.l.b16 %v188
  %v319 = vunpack.c.h.b16 %v188
  %v320 = vunpack.c.l.b16 %v189
  %v321 = vunpack.c.h.b16 %v189
  %v322 = vunpack.c.l.b16 %v190
  %v323 = vunpack.c.h.b16 %v190
  %v324 = vunpack.c.l.b16 %v191
  %v325 = vunpack.c.h.b16 %v191
  %v326 = vunpack.c.l.b16 %v192
  %v327 = vunpack.c.h.b16 %v192
  %v328 = vunpack.c.l.b16 %v193
  %v329 = vunpack.c.h.b16 %v193
  %v330 = vunpack.c.l.b16 %v194
  %v331 = vunpack.c.h.b16 %v194
  %v332 = vunpack.c.l.b16 %v195
  %v333 = vunpack.c.h.b16 %v195
  %v334 = vunpack.c.l.b16 %v196
  %v335 = vunpack.c.h.b16 %v196
  %v336 = vunpack.c.l.b16 %v197
  %v337 = vunpack.c.h.b16 %v197
  %v338 = vunpack.c.l.b16 %v198
  %v339 = vunpack.c.h.b16 %v198
  %v340 = vunpack.c.l.b16 %v199
  %v341 = vunpack.c.h.b16 %v199
  %v342 = vunpack.c.l.b16 %v200
  %v343 = vunpack.c.h.b16 %v200
  %v344 = vunpack.c.l.b16 %v201
  %v345 = vunpack.c.h.b16 %v201
  %v346 = vunpack.c.l.b16 %v202
  %v347 = vunpack.c.h.b16 %v202
  %v348 = vunpack.c.l.b16 %v203
  %v349 = vunpack.c.h.b16 %v203
  %v350 = vunpack.c.l.b16 %v204
  %v351 = vunpack.c.h.b16 %v204
  %v352 = vunpack.c.l.b16 %v205
  %v353 = vunpack.c.h.b16 %v205
  %v354 = vunpack.c.l.b16 %v206
  %v355 = vunpack.c.h.b16 %v206
  %v356 = vunpack.c.l.b16 %v207
  %v357 = vunpack.c.h.b16 %v207
  %v358 = vunpack.c.l.b16 %v208
  %v359 = vunpack.c.h.b16 %v208
  %v360 = vunpack.c.l.b16 %v209
  %v361 = vunpack.c.h.b16 %v209
  %v362 = vunpack.c.l.b16 %v210
  %v363 = vunpack.c.h.b16 %v210
  %v364 = vunpack.c.l.b16 %v211
  %v365 = vunpack.c.h.b16 %v211
  %v366 = vunpack.c.l.b16 %v212
  %v367 = vunpack.c.h.b16 %v212
  %v368 = vunpack.c.l.b16 %v213
  %v369 = vunpack.c.h.b16 %v213
  %v370 = vunpack.c.l.b16 %v214
  %v371 = vunpack.c.h.b16 %v214
  %v372 = vunpack.c.l.b16 %v215
  %v373 = vunpack.c.h.b16 %v215
  %v374 = vunpack.c.l.b16 %v216
  %v375 = vunpack.c.h.b16 %v216
  %v376 = vunpack.c.l.b16 %v217
  %v377 = vunpack.c.h.b16 %v217
  %v378 = vunpack.c.l.b16 %v218
  %v379 = vunpack.c.h.b16 %v218
  %v380 = vunpack.c.l.b16 %v219
  %v381 = vunpack.c.h.b16 %v219
  %v382 = vunpack.c.l.b16 %v220
  %v383 = vunpack.c.h.b16 %v220
  %v384 = vunpack.c.l.b16 %v221
  %v385 = vunpack.c.h.b16 %v221
  %v386 = vunpack.c.l.b16 %v222
  %v387 = vunpack.c.h.b16 %v222
  %v388 = vunpack.c.l.b16 %v223
  %v389 = vunpack.c.h.b16 %v223
  %v390 = vunpack.c.l.b16 %v224
  %v391 = vunpack.c.h.b16 %v224
  %v392 = vunpack.c.l.b16 %v225
  %v393 = vunpack.c.h.b16 %v225
  %v394 = vpack.c.b16 %v300, %v298
  %v395 = vpack.c.b16 %v301, %v299
  %v396 = vpack.c.b16 %v304, %v302
  %v397 = vpack.c.b16 %v305, %v303
  %v398 = vpack.c.b16 %v308, %v306
  %v399 = vpack.c.b16 %v309, %v307
  %v400 = vpack.c.b16 %v312, %v310
  %v401 = vpack.c.b16 %v313, %v311
  %v402 = vpack.c.b16 %v316, %v314
  %v403 = vpack.c.b16 %v317, %v315
  %v404 = vpack.c.b16 %v320, %v318
  %v405 = vpack.c.b16 %v321, %v319
  %v406 = vpack.c.b16 %v324, %v322
  %v407 = vpack.c.b16 %v325, %v323
  %v408 = vpack.c.b16 %v328, %v326
  %v409 = vpack.c.b16 %v329, %v327
  %v410 = vpack.c.b16 %v332, %v330
  %v411 = vpack.c.b16 %v333, %v331
  %v412 = vpack.c.b16 %v336, %v334
  %v413 = vpack.c.b16 %v337, %v335
  %v414 = vpack.c.b16 %v340, %v338
  %v415 = vpack.c.b16 %v341, %v339
  %v416 = vpack.c.b16 %v344, %v342
  %v417 = vpack.c.b16 %v345, %v343
  %v418 = vpack.c.b16 %v348, %v346
  %v419 = vpack.c.b16 %v349, %v347
  %v420 = vpack.c.b16 %v352, %v350
  %v421 = vpack.c.b16 %v353, %v351
  %v422 = vpack.c.b16 %v356, %v354
  %v423 = vpack.c.b16 %v357, %v355
  %v424 = vpack.c.b16 %v360, %v358
  %v425 = vpack.c.b16 %v361, %v359
  %v426 = vpack.c.b16 %v364, %v362
  %v427 = vpack.c.b16 %v365, %v363
  %v428 = vpack.c.b16 %v368, %v366
  %v429 = vpack.c.b16 %v369, %v367
  %v430 = vpack.c.b16 %v372, %v370
  %v431 = vpack.c.b16 %v373, %v371
  %v432 = vpack.c.b16 %v376, %v374
  %v433 = vpack.c.b16 %v377, %v375
  %v434 = vpack.c.b16 %v380, %v378
  %v435 = vpack.c.b16 %v381, %v379
  %v436 = vpack.c.b16 %v384, %v382
  %v437 = vpack.c.b16 %v385, %v383
  %v438 = vpack.c.b16 %v388, %v386
  %v439 = vpack.c.b16 %v389, %v387
  %v440 = vpack.c.b16 %v392, %v390
  %v441 = vpack.c.b16 %v393, %v391
  %490 = vmatprep.subr.bf16.mxu0 %v395
  %491 = vmatpush1.bf16.msra.mxu0 %v394
  %492 = vmatprep.subr.bf16.mxu0 %v397
  %493 = vmatpush1.bf16.msra.mxu0 %v396
  %494 = vmatprep.subr.bf16.mxu0 %v399
  %495 = vmatpush1.bf16.msra.mxu0 %v398
  %496 = vmatprep.subr.bf16.mxu0 %v401
  %497 = vmatpush1.bf16.msra.mxu0 %v400
  %498 = vmatprep.subr.bf16.mxu0 %v403
  %499 = vmatpush1.bf16.msra.mxu0 %v402
  %500 = vmatprep.subr.bf16.mxu0 %v405
  %501 = vmatpush1.bf16.msra.mxu0 %v404
  %502 = vmatprep.subr.bf16.mxu0 %v407
  %503 = vmatpush1.bf16.msra.mxu0 %v406
  %504 = vmatprep.subr.bf16.mxu0 %v409
  %505 = vmatpush1.bf16.msra.mxu0 %v408
  %506 = vmatprep.subr.bf16.mxu0 %v411
  %507 = vmatpush1.bf16.msra.mxu0 %v410
  %508 = vmatprep.subr.bf16.mxu0 %v413
  %509 = vmatpush1.bf16.msra.mxu0 %v412
  %510 = vmatprep.subr.bf16.mxu0 %v415
  %511 = vmatpush1.bf16.msra.mxu0 %v414
  %512 = vmatprep.subr.bf16.mxu0 %v417
  %513 = vmatpush1.bf16.msra.mxu0 %v416
  %514 = vmatprep.subr.bf16.mxu0 %v419
  %515 = vmatpush1.bf16.msra.mxu0 %v418
  %516 = vmatprep.subr.bf16.mxu0 %v421
  %517 = vmatpush1.bf16.msra.mxu0 %v420
  %518 = vmatprep.subr.bf16.mxu0 %v423
  %519 = vmatpush1.bf16.msra.mxu0 %v422
  %520 = vmatprep.subr.bf16.mxu0 %v425
  %521 = vmatpush1.bf16.msra.mxu0 %v424
  %522 = vmatprep.mubr.bf16.mxu0 %v239
  %523 = vmatmul.mubr.bf16.gmra.mrb[0].mxu0 %v238
  %v524 = vpop.f32.mrb[0].mxu0
  %v525 = vadd.f32 0.0, %v524
  %v526 = vpop.f32.mrb[0].mxu0
  %v527 = vadd.f32 0.0, %v526
  %v528 = vpop.f32.mrb[0].mxu0
  %v529 = vadd.f32 0.0, %v528
  %v530 = vpop.f32.mrb[0].mxu0
  %v531 = vadd.f32 0.0, %v530
  %532 = vmatprep.mubr.bf16.mxu0 %v242
  %533 = vmatmul.mubr.bf16.gmra.mrb[0].mxu0 %v241
  %v534 = vpop.f32.mrb[0].mxu0
  %v535 = vadd.f32 0.0, %v534
  %v536 = vpop.f32.mrb[0].mxu0
  %v537 = vadd.f32 0.0, %v536
  %v538 = vpop.f32.mrb[0].mxu0
  %v539 = vadd.f32 0.0, %v538
  %v540 = vpop.f32.mrb[0].mxu0
  %v541 = vadd.f32 0.0, %v540
  %542 = vdwg.mxu0
  %543 = vmatprep.subr.bf16.mxu0 %v427
  %544 = vmatpush1.bf16.msra.mxu0 %v426
  %545 = vmatprep.subr.bf16.mxu0 %v429
  %546 = vmatpush1.bf16.msra.mxu0 %v428
  %547 = vmatprep.subr.bf16.mxu0 %v431
  %548 = vmatpush1.bf16.msra.mxu0 %v430
  %549 = vmatprep.subr.bf16.mxu0 %v433
  %550 = vmatpush1.bf16.msra.mxu0 %v432
  %551 = vmatprep.subr.bf16.mxu0 %v435
  %552 = vmatpush1.bf16.msra.mxu0 %v434
  %553 = vmatprep.subr.bf16.mxu0 %v437
  %554 = vmatpush1.bf16.msra.mxu0 %v436
  %555 = vmatprep.subr.bf16.mxu0 %v439
  %556 = vmatpush1.bf16.msra.mxu0 %v438
  %557 = vmatprep.subr.bf16.mxu0 %v441
  %558 = vmatpush1.bf16.msra.mxu0 %v440
  %559 = vmatprep.subr.bf16.mxu0 0
  %560 = vmatpush1.bf16.msra.mxu0 0
  %561 = vmatprep.subr.bf16.mxu0 0
  %562 = vmatpush1.bf16.msra.mxu0 0
  %563 = vmatprep.subr.bf16.mxu0 0
  %564 = vmatpush1.bf16.msra.mxu0 0
  %565 = vmatprep.subr.bf16.mxu0 0
  %566 = vmatpush1.bf16.msra.mxu0 0
  %567 = vmatprep.subr.bf16.mxu0 0
  %568 = vmatpush1.bf16.msra.mxu0 0
  %569 = vmatprep.subr.bf16.mxu0 0
  %570 = vmatpush1.bf16.msra.mxu0 0
  %571 = vmatprep.subr.bf16.mxu0 0
  %572 = vmatpush1.bf16.msra.mxu0 0
  %573 = vmatprep.subr.bf16.mxu0 0
  %574 = vmatpush1.bf16.msra.mxu0 0
  %575 = vmatprep.mubr.bf16.mxu0 0
  %576 = vmatmul.mubr.bf16.gmra.mrb[0].mxu0 %v240
  %v577 = vpop.f32.mrb[0].mxu0
  %v578 = vadd.f32 %v525, %v577
  %v579 = vpop.f32.mrb[0].mxu0
  %v580 = vadd.f32 %v527, %v579
  %v581 = vpop.f32.mrb[0].mxu0
  %v582 = vadd.f32 %v529, %v581
  %v583 = vpop.f32.mrb[0].mxu0
  %v584 = vadd.f32 %v531, %v583
  %585 = vmatprep.mubr.bf16.mxu0 0
  %586 = vmatmul.mubr.bf16.gmra.mrb[0].mxu0 %v243
  %v587 = vpop.f32.mrb[0].mxu0
  %v588 = vadd.f32 %v535, %v587
  %v589 = vpop.f32.mrb[0].mxu0
  %v590 = vadd.f32 %v537, %v589
  %v591 = vpop.f32.mrb[0].mxu0
  %v592 = vadd.f32 %v539, %v591
  %v593 = vpop.f32.mrb[0].mxu0
  %v594 = vadd.f32 %v541, %v593
  %595 = vdwg.mxu0
  %v604 = vunpack.c.l.b16 %v18
  %v605 = vunpack.c.h.b16 %v18
  %v606 = vunpack.c.l.b16 %v19
  %v607 = vunpack.c.l.b16 %v20
  %v608 = vunpack.c.h.b16 %v20
  %v609 = vunpack.c.l.b16 %v21
  %v610 = vunpack.c.l.b16 %v22
  %v611 = vunpack.c.h.b16 %v22
  %v612 = vunpack.c.l.b16 %v23
  %v613 = vunpack.c.l.b16 %v24
  %v614 = vunpack.c.h.b16 %v24
  %v615 = vunpack.c.l.b16 %v25
  %v616 = vpack.c.b16 %v607, %v604
  %v617 = vpack.c.b16 %v608, %v605
  %v618 = vpack.c.b16 %v609, %v606
  %v619 = vpack.c.b16 %v613, %v610
  %v620 = vpack.c.b16 %v614, %v611
  %v621 = vpack.c.b16 %v615, %v612
  %v676 = vunpack.c.l.b16 %v26
  %v677 = vunpack.c.h.b16 %v26
  %v678 = vunpack.c.l.b16 %v27
  %v679 = vunpack.c.h.b16 %v27
  %v680 = vunpack.c.l.b16 %v28
  %v681 = vunpack.c.h.b16 %v28
  %v682 = vunpack.c.l.b16 %v29
  %v683 = vunpack.c.h.b16 %v29
  %v684 = vunpack.c.l.b16 %v30
  %v685 = vunpack.c.h.b16 %v30
  %v686 = vunpack.c.l.b16 %v31
  %v687 = vunpack.c.h.b16 %v31
  %v688 = vunpack.c.l.b16 %v32
  %v689 = vunpack.c.h.b16 %v32
  %v690 = vunpack.c.l.b16 %v33
  %v691 = vunpack.c.h.b16 %v33
  %v692 = vunpack.c.l.b16 %v34
  %v693 = vunpack.c.h.b16 %v34
  %v694 = vunpack.c.l.b16 %v35
  %v695 = vunpack.c.h.b16 %v35
  %v696 = vunpack.c.l.b16 %v36
  %v697 = vunpack.c.h.b16 %v36
  %v698 = vunpack.c.l.b16 %v37
  %v699 = vunpack.c.h.b16 %v37
  %v700 = vunpack.c.l.b16 %v38
  %v701 = vunpack.c.h.b16 %v38
  %v702 = vunpack.c.l.b16 %v39
  %v703 = vunpack.c.h.b16 %v39
  %v704 = vunpack.c.l.b16 %v40
  %v705 = vunpack.c.h.b16 %v40
  %v706 = vunpack.c.l.b16 %v41
  %v707 = vunpack.c.h.b16 %v41
  %v708 = vunpack.c.l.b16 %v42
  %v709 = vunpack.c.h.b16 %v42
  %v710 = vunpack.c.l.b16 %v43
  %v711 = vunpack.c.h.b16 %v43
  %v712 = vunpack.c.l.b16 %v44
  %v713 = vunpack.c.h.b16 %v44
  %v714 = vunpack.c.l.b16 %v45
  %v715 = vunpack.c.h.b16 %v45
  %v716 = vunpack.c.l.b16 %v46
  %v717 = vunpack.c.h.b16 %v46
  %v718 = vunpack.c.l.b16 %v47
  %v719 = vunpack.c.h.b16 %v47
  %v720 = vunpack.c.l.b16 %v48
  %v721 = vunpack.c.h.b16 %v48
  %v722 = vunpack.c.l.b16 %v49
  %v723 = vunpack.c.h.b16 %v49
  %v724 = vunpack.c.l.b16 %v50
  %v725 = vunpack.c.h.b16 %v50
  %v726 = vunpack.c.l.b16 %v51
  %v727 = vunpack.c.h.b16 %v51
  %v728 = vunpack.c.l.b16 %v52
  %v729 = vunpack.c.h.b16 %v52
  %v730 = vunpack.c.l.b16 %v53
  %v731 = vunpack.c.h.b16 %v53
  %v732 = vunpack.c.l.b16 %v54
  %v733 = vunpack.c.h.b16 %v54
  %v734 = vunpack.c.l.b16 %v55
  %v735 = vunpack.c.h.b16 %v55
  %v736 = vunpack.c.l.b16 %v56
  %v737 = vunpack.c.h.b16 %v56
  %v738 = vunpack.c.l.b16 %v57
  %v739 = vunpack.c.h.b16 %v57
  %v740 = vunpack.c.l.b16 %v58
  %v741 = vunpack.c.h.b16 %v58
  %v742 = vunpack.c.l.b16 %v59
  %v743 = vunpack.c.h.b16 %v59
  %v744 = vunpack.c.l.b16 %v60
  %v745 = vunpack.c.h.b16 %v60
  %v746 = vunpack.c.l.b16 %v61
  %v747 = vunpack.c.h.b16 %v61
  %v748 = vunpack.c.l.b16 %v62
  %v749 = vunpack.c.h.b16 %v62
  %v750 = vunpack.c.l.b16 %v63
  %v751 = vunpack.c.h.b16 %v63
  %v752 = vunpack.c.l.b16 %v64
  %v753 = vunpack.c.h.b16 %v64
  %v754 = vunpack.c.l.b16 %v65
  %v755 = vunpack.c.h.b16 %v65
  %v756 = vunpack.c.l.b16 %v66
  %v757 = vunpack.c.h.b16 %v66
  %v758 = vunpack.c.l.b16 %v67
  %v759 = vunpack.c.h.b16 %v67
  %v760 = vunpack.c.l.b16 %v68
  %v761 = vunpack.c.h.b16 %v68
  %v762 = vunpack.c.l.b16 %v69
  %v763 = vunpack.c.h.b16 %v69
  %v764 = vunpack.c.l.b16 %v70
  %v765 = vunpack.c.h.b16 %v70
  %v766 = vunpack.c.l.b16 %v71
  %v767 = vunpack.c.h.b16 %v71
  %v768 = vunpack.c.l.b16 %v72
  %v769 = vunpack.c.h.b16 %v72
  %v770 = vunpack.c.l.b16 %v73
  %v771 = vunpack.c.h.b16 %v73
  %v772 = vpack.c.b16 %v678, %v676
  %v773 = vpack.c.b16 %v679, %v677
  %v774 = vpack.c.b16 %v682, %v680
  %v775 = vpack.c.b16 %v683, %v681
  %v776 = vpack.c.b16 %v686, %v684
  %v777 = vpack.c.b16 %v687, %v685
  %v778 = vpack.c.b16 %v690, %v688
  %v779 = vpack.c.b16 %v691, %v689
  %v780 = vpack.c.b16 %v694, %v692
  %v781 = vpack.c.b16 %v695, %v693
  %v782 = vpack.c.b16 %v698, %v696
  %v783 = vpack.c.b16 %v699, %v697
  %v784 = vpack.c.b16 %v702, %v700
  %v785 = vpack.c.b16 %v703, %v701
  %v786 = vpack.c.b16 %v706, %v704
  %v787 = vpack.c.b16 %v707, %v705
  %v788 = vpack.c.b16 %v710, %v708
  %v789 = vpack.c.b16 %v711, %v709
  %v790 = vpack.c.b16 %v714, %v712
  %v791 = vpack.c.b16 %v715, %v713
  %v792 = vpack.c.b16 %v718, %v716
  %v793 = vpack.c.b16 %v719, %v717
  %v794 = vpack.c.b16 %v722, %v720
  %v795 = vpack.c.b16 %v723, %v721
  %v796 = vpack.c.b16 %v726, %v724
  %v797 = vpack.c.b16 %v727, %v725
  %v798 = vpack.c.b16 %v730, %v728
  %v799 = vpack.c.b16 %v731, %v729
  %v800 = vpack.c.b16 %v734, %v732
  %v801 = vpack.c.b16 %v735, %v733
  %v802 = vpack.c.b16 %v738, %v736
  %v803 = vpack.c.b16 %v739, %v737
  %v804 = vpack.c.b16 %v742, %v740
  %v805 = vpack.c.b16 %v743, %v741
  %v806 = vpack.c.b16 %v746, %v744
  %v807 = vpack.c.b16 %v747, %v745
  %v808 = vpack.c.b16 %v750, %v748
  %v809 = vpack.c.b16 %v751, %v749
  %v810 = vpack.c.b16 %v754, %v752
  %v811 = vpack.c.b16 %v755, %v753
  %v812 = vpack.c.b16 %v758, %v756
  %v813 = vpack.c.b16 %v759, %v757
  %v814 = vpack.c.b16 %v762, %v760
  %v815 = vpack.c.b16 %v763, %v761
  %v816 = vpack.c.b16 %v766, %v764
  %v817 = vpack.c.b16 %v767, %v765
  %v818 = vpack.c.b16 %v770, %v768
  %v819 = vpack.c.b16 %v771, %v769
  %868 = vmatprep.subr.bf16.mxu0 %v773
  %869 = vmatpush1.bf16.msra.mxu0 %v772
  %870 = vmatprep.subr.bf16.mxu0 %v775
  %871 = vmatpush1.bf16.msra.mxu0 %v774
  %872 = vmatprep.subr.bf16.mxu0 %v777
  %873 = vmatpush1.bf16.msra.mxu0 %v776
  %874 = vmatprep.subr.bf16.mxu0 %v779
  %875 = vmatpush1.bf16.msra.mxu0 %v778
  %876 = vmatprep.subr.bf16.mxu0 %v781
  %877 = vmatpush1.bf16.msra.mxu0 %v780
  %878 = vmatprep.subr.bf16.mxu0 %v783
  %879 = vmatpush1.bf16.msra.mxu0 %v782
  %880 = vmatprep.subr.bf16.mxu0 %v785
  %881 = vmatpush1.bf16.msra.mxu0 %v784
  %882 = vmatprep.subr.bf16.mxu0 %v787
  %883 = vmatpush1.bf16.msra.mxu0 %v786
  %884 = vmatprep.subr.bf16.mxu0 %v789
  %885 = vmatpush1.bf16.msra.mxu0 %v788
  %886 = vmatprep.subr.bf16.mxu0 %v791
  %887 = vmatpush1.bf16.msra.mxu0 %v790
  %888 = vmatprep.subr.bf16.mxu0 %v793
  %889 = vmatpush1.bf16.msra.mxu0 %v792
  %890 = vmatprep.subr.bf16.mxu0 %v795
  %891 = vmatpush1.bf16.msra.mxu0 %v794
  %892 = vmatprep.subr.bf16.mxu0 %v797
  %893 = vmatpush1.bf16.msra.mxu0 %v796
  %894 = vmatprep.subr.bf16.mxu0 %v799
  %895 = vmatpush1.bf16.msra.mxu0 %v798
  %896 = vmatprep.subr.bf16.mxu0 %v801
  %897 = vmatpush1.bf16.msra.mxu0 %v800
  %898 = vmatprep.subr.bf16.mxu0 %v803
  %899 = vmatpush1.bf16.msra.mxu0 %v802
  %900 = vmatprep.mubr.bf16.mxu0 %v617
  %901 = vmatmul.mubr.bf16.gmra.mrb[0].mxu0 %v616
  %v902 = vpop.f32.mrb[0].mxu0
  %v903 = vadd.f32 %v578, %v902
  %v904 = vpop.f32.mrb[0].mxu0
  %v905 = vadd.f32 %v580, %v904
  %v906 = vpop.f32.mrb[0].mxu0
  %v907 = vadd.f32 %v582, %v906
  %v908 = vpop.f32.mrb[0].mxu0
  %v909 = vadd.f32 %v584, %v908
  %910 = vmatprep.mubr.bf16.mxu0 %v620
  %911 = vmatmul.mubr.bf16.gmra.mrb[0].mxu0 %v619
  %v912 = vpop.f32.mrb[0].mxu0
  %v913 = vadd.f32 %v588, %v912
  %v914 = vpop.f32.mrb[0].mxu0
  %v915 = vadd.f32 %v590, %v914
  %v916 = vpop.f32.mrb[0].mxu0
  %v917 = vadd.f32 %v592, %v916
  %v918 = vpop.f32.mrb[0].mxu0
  %v919 = vadd.f32 %v594, %v918
  %920 = vdwg.mxu0
  %921 = vmatprep.subr.bf16.mxu0 %v805
  %922 = vmatpush1.bf16.msra.mxu0 %v804
  %923 = vmatprep.subr.bf16.mxu0 %v807
  %924 = vmatpush1.bf16.msra.mxu0 %v806
  %925 = vmatprep.subr.bf16.mxu0 %v809
  %926 = vmatpush1.bf16.msra.mxu0 %v808
  %927 = vmatprep.subr.bf16.mxu0 %v811
  %928 = vmatpush1.bf16.msra.mxu0 %v810
  %929 = vmatprep.subr.bf16.mxu0 %v813
  %930 = vmatpush1.bf16.msra.mxu0 %v812
  %931 = vmatprep.subr.bf16.mxu0 %v815
  %932 = vmatpush1.bf16.msra.mxu0 %v814
  %933 = vmatprep.subr.bf16.mxu0 %v817
  %934 = vmatpush1.bf16.msra.mxu0 %v816
  %935 = vmatprep.subr.bf16.mxu0 %v819
  %936 = vmatpush1.bf16.msra.mxu0 %v818
  %937 = vmatprep.subr.bf16.mxu0 0
  %938 = vmatpush1.bf16.msra.mxu0 0
  %939 = vmatprep.subr.bf16.mxu0 0
  %940 = vmatpush1.bf16.msra.mxu0 0
  %941 = vmatprep.subr.bf16.mxu0 0
  %942 = vmatpush1.bf16.msra.mxu0 0
  %943 = vmatprep.subr.bf16.mxu0 0
  %944 = vmatpush1.bf16.msra.mxu0 0
  %945 = vmatprep.subr.bf16.mxu0 0
  %946 = vmatpush1.bf16.msra.mxu0 0
  %947 = vmatprep.subr.bf16.mxu0 0
  %948 = vmatpush1.bf16.msra.mxu0 0
  %949 = vmatprep.subr.bf16.mxu0 0
  %950 = vmatpush1.bf16.msra.mxu0 0
  %951 = vmatprep.subr.bf16.mxu0 0
  %952 = vmatpush1.bf16.msra.mxu0 0
  %953 = vmatprep.mubr.bf16.mxu0 0
  %954 = vmatmul.mubr.bf16.gmra.mrb[0].mxu0 %v618
  %v955 = vpop.f32.mrb[0].mxu0
  %v956 = vadd.f32 %v903, %v955
  %v957 = vpop.f32.mrb[0].mxu0
  %v958 = vadd.f32 %v905, %v957
  %v959 = vpop.f32.mrb[0].mxu0
  %v960 = vadd.f32 %v907, %v959
  %v961 = vpop.f32.mrb[0].mxu0
  %v962 = vadd.f32 %v909, %v961
  %963 = vmatprep.mubr.bf16.mxu0 0
  %964 = vmatmul.mubr.bf16.gmra.mrb[0].mxu0 %v621
  %v965 = vpop.f32.mrb[0].mxu0
  %v966 = vadd.f32 %v913, %v965
  %v967 = vpop.f32.mrb[0].mxu0
  %v968 = vadd.f32 %v915, %v967
  %v969 = vpop.f32.mrb[0].mxu0
  %v970 = vadd.f32 %v917, %v969
  %v971 = vpop.f32.mrb[0].mxu0
  %v972 = vadd.f32 %v919, %v971
  %973 = vdwg.mxu0
  %v974 = vld [vmem:[%s0] sm:$0xee]
  %v975 = vld [vmem:[%s0 + $0x8] sm:$0xe]
  %v976 = vld [vmem:[%s0 + $0x24] sm:$0xee]
  %v977 = vld [vmem:[%s0 + $0x2c] sm:$0xe]
  %vm986 = vcmask 1042432
  %vm987 = vcmask 1046532
  %vm988 = vmor %vm986, %vm987
  %v989 = vrot.slane %v974, 5
  %v990 = vrot.slane %v989, 4
  %v991 = vrot.slane %v20, 5
  %v992 = vsel %vm988, %v990, %v991
  %v993 = vrot.slane %v975, 5
  %v994 = vrot.slane %v993, 4
  %v995 = vrot.slane %v21, 5
  %v996 = vsel %vm988, %v994, %v995
  %v997 = vrot.slane %v991, 4
  %v998 = vrot.slane %v74, 5
  %v999 = vsel %vm988, %v997, %v998
  %v1000 = vrot.slane %v995, 4
  %v1001 = vrot.slane %v75, 5
  %v1002 = vsel %vm988, %v1000, %v1001
  %v1003 = vrot.slane %v976, 5
  %v1004 = vrot.slane %v1003, 4
  %v1005 = vrot.slane %v24, 5
  %v1006 = vsel %vm988, %v1004, %v1005
  %v1007 = vrot.slane %v977, 5
  %v1008 = vrot.slane %v1007, 4
  %v1009 = vrot.slane %v25, 5
  %v1010 = vsel %vm988, %v1008, %v1009
  %v1011 = vrot.slane %v1005, 4
  %v1012 = vrot.slane %v76, 5
  %v1013 = vsel %vm988, %v1011, %v1012
  %v1014 = vrot.slane %v1009, 4
  %v1015 = vrot.slane %v77, 5
  %v1016 = vsel %vm988, %v1014, %v1015
  %s1017 = scalar_lea.vmem %s1, 768
  %v1018 = vld [vmem:[%s1017] sm:$0xff]
  %v1019 = vld [vmem:[%s1017 + $0x8] sm:$0xff]
  %v1020 = vld [vmem:[%s1017 + $0x10] sm:$0xff]
  %v1021 = vld [vmem:[%s1017 + $0x18] sm:$0xff]
  %v1022 = vld [vmem:[%s1017 + $0x20] sm:$0xff]
  %v1023 = vld [vmem:[%s1017 + $0x28] sm:$0xff]
  %v1024 = vld [vmem:[%s1017 + $0x30] sm:$0xff]
  %v1025 = vld [vmem:[%s1017 + $0x38] sm:$0xff]
  %v1026 = vld [vmem:[%s1017 + $0x40] sm:$0xff]
  %v1027 = vld [vmem:[%s1017 + $0x48] sm:$0xff]
  %v1028 = vld [vmem:[%s1017 + $0x50] sm:$0xff]
  %v1029 = vld [vmem:[%s1017 + $0x58] sm:$0xff]
  %v1030 = vld [vmem:[%s1017 + $0x60] sm:$0xff]
  %v1031 = vld [vmem:[%s1017 + $0x68] sm:$0xff]
  %v1032 = vld [vmem:[%s1017 + $0x70] sm:$0xff]
  %v1033 = vld [vmem:[%s1017 + $0x78] sm:$0xff]
  %v1034 = vld [vmem:[%s1017 + $0x80] sm:$0xff]
  %v1035 = vld [vmem:[%s1017 + $0x88] sm:$0xff]
  %v1036 = vld [vmem:[%s1017 + $0x90] sm:$0xff]
  %v1037 = vld [vmem:[%s1017 + $0x98] sm:$0xff]
  %v1038 = vld [vmem:[%s1017 + $0xa0] sm:$0xff]
  %v1039 = vld [vmem:[%s1017 + $0xa8] sm:$0xff]
  %v1040 = vld [vmem:[%s1017 + $0xb0] sm:$0xff]
  %v1041 = vld [vmem:[%s1017 + $0xb8] sm:$0xff]
  %v1042 = vld [vmem:[%s1017 + $0xc0] sm:$0xff]
  %v1043 = vld [vmem:[%s1017 + $0xc8] sm:$0xff]
  %v1044 = vld [vmem:[%s1017 + $0xd0] sm:$0xff]
  %v1045 = vld [vmem:[%s1017 + $0xd8] sm:$0xff]
  %v1046 = vld [vmem:[%s1017 + $0xe0] sm:$0xff]
  %v1047 = vld [vmem:[%s1017 + $0xe8] sm:$0xff]
  %v1048 = vld [vmem:[%s1017 + $0xf0] sm:$0xff]
  %v1049 = vld [vmem:[%s1017 + $0xf8] sm:$0xff]
  %v1050 = vld [vmem:[%s1017 + $0x100] sm:$0xff]
  %v1051 = vld [vmem:[%s1017 + $0x108] sm:$0xff]
  %v1052 = vld [vmem:[%s1017 + $0x110] sm:$0xff]
  %v1053 = vld [vmem:[%s1017 + $0x118] sm:$0xff]
  %v1054 = vld [vmem:[%s1017 + $0x120] sm:$0xff]
  %v1055 = vld [vmem:[%s1017 + $0x128] sm:$0xff]
  %v1056 = vld [vmem:[%s1017 + $0x130] sm:$0xff]
  %v1057 = vld [vmem:[%s1017 + $0x138] sm:$0xff]
  %v1058 = vld [vmem:[%s1017 + $0x140] sm:$0xff]
  %v1059 = vld [vmem:[%s1017 + $0x148] sm:$0xff]
  %v1060 = vld [vmem:[%s1017 + $0x150] sm:$0xff]
  %v1061 = vld [vmem:[%s1017 + $0x158] sm:$0xff]
  %v1062 = vld [vmem:[%s1017 + $0x160] sm:$0xff]
  %v1063 = vld [vmem:[%s1017 + $0x168] sm:$0xff]
  %v1064 = vld [vmem:[%s1017 + $0x170] sm:$0xff]
  %v1065 = vld [vmem:[%s1017 + $0x178] sm:$0xff]
  %v1066 = vunpack.c.l.b16 %v992
  %v1067 = vunpack.c.h.b16 %v992
  %v1068 = vunpack.c.l.b16 %v996
  %v1069 = vunpack.c.l.b16 %v999
  %v1070 = vunpack.c.h.b16 %v999
  %v1071 = vunpack.c.l.b16 %v1002
  %v1072 = vunpack.c.l.b16 %v1006
  %v1073 = vunpack.c.h.b16 %v1006
  %v1074 = vunpack.c.l.b16 %v1010
  %v1075 = vunpack.c.l.b16 %v1013
  %v1076 = vunpack.c.h.b16 %v1013
  %v1077 = vunpack.c.l.b16 %v1016
  %v1078 = vpack.c.b16 %v1069, %v1066
  %v1079 = vpack.c.b16 %v1070, %v1067
  %v1080 = vpack.c.b16 %v1071, %v1068
  %v1081 = vpack.c.b16 %v1075, %v1072
  %v1082 = vpack.c.b16 %v1076, %v1073
  %v1083 = vpack.c.b16 %v1077, %v1074
  %v1138 = vunpack.c.l.b16 %v1018
  %v1139 = vunpack.c.h.b16 %v1018
  %v1140 = vunpack.c.l.b16 %v1019
  %v1141 = vunpack.c.h.b16 %v1019
  %v1142 = vunpack.c.l.b16 %v1020
  %v1143 = vunpack.c.h.b16 %v1020
  %v1144 = vunpack.c.l.b16 %v1021
  %v1145 = vunpack.c.h.b16 %v1021
  %v1146 = vunpack.c.l.b16 %v1022
  %v1147 = vunpack.c.h.b16 %v1022
  %v1148 = vunpack.c.l.b16 %v1023
  %v1149 = vunpack.c.h.b16 %v1023
  %v1150 = vunpack.c.l.b16 %v1024
  %v1151 = vunpack.c.h.b16 %v1024
  %v1152 = vunpack.c.l.b16 %v1025
  %v1153 = vunpack.c.h.b16 %v1025
  %v1154 = vunpack.c.l.b16 %v1026
  %v1155 = vunpack.c.h.b16 %v1026
  %v1156 = vunpack.c.l.b16 %v1027
  %v1157 = vunpack.c.h.b16 %v1027
  %v1158 = vunpack.c.l.b16 %v1028
  %v1159 = vunpack.c.h.b16 %v1028
  %v1160 = vunpack.c.l.b16 %v1029
  %v1161 = vunpack.c.h.b16 %v1029
  %v1162 = vunpack.c.l.b16 %v1030
  %v1163 = vunpack.c.h.b16 %v1030
  %v1164 = vunpack.c.l.b16 %v1031
  %v1165 = vunpack.c.h.b16 %v1031
  %v1166 = vunpack.c.l.b16 %v1032
  %v1167 = vunpack.c.h.b16 %v1032
  %v1168 = vunpack.c.l.b16 %v1033
  %v1169 = vunpack.c.h.b16 %v1033
  %v1170 = vunpack.c.l.b16 %v1034
  %v1171 = vunpack.c.h.b16 %v1034
  %v1172 = vunpack.c.l.b16 %v1035
  %v1173 = vunpack.c.h.b16 %v1035
  %v1174 = vunpack.c.l.b16 %v1036
  %v1175 = vunpack.c.h.b16 %v1036
  %v1176 = vunpack.c.l.b16 %v1037
  %v1177 = vunpack.c.h.b16 %v1037
  %v1178 = vunpack.c.l.b16 %v1038
  %v1179 = vunpack.c.h.b16 %v1038
  %v1180 = vunpack.c.l.b16 %v1039
  %v1181 = vunpack.c.h.b16 %v1039
  %v1182 = vunpack.c.l.b16 %v1040
  %v1183 = vunpack.c.h.b16 %v1040
  %v1184 = vunpack.c.l.b16 %v1041
  %v1185 = vunpack.c.h.b16 %v1041
  %v1186 = vunpack.c.l.b16 %v1042
  %v1187 = vunpack.c.h.b16 %v1042
  %v1188 = vunpack.c.l.b16 %v1043
  %v1189 = vunpack.c.h.b16 %v1043
  %v1190 = vunpack.c.l.b16 %v1044
  %v1191 = vunpack.c.h.b16 %v1044
  %v1192 = vunpack.c.l.b16 %v1045
  %v1193 = vunpack.c.h.b16 %v1045
  %v1194 = vunpack.c.l.b16 %v1046
  %v1195 = vunpack.c.h.b16 %v1046
  %v1196 = vunpack.c.l.b16 %v1047
  %v1197 = vunpack.c.h.b16 %v1047
  %v1198 = vunpack.c.l.b16 %v1048
  %v1199 = vunpack.c.h.b16 %v1048
  %v1200 = vunpack.c.l.b16 %v1049
  %v1201 = vunpack.c.h.b16 %v1049
  %v1202 = vunpack.c.l.b16 %v1050
  %v1203 = vunpack.c.h.b16 %v1050
  %v1204 = vunpack.c.l.b16 %v1051
  %v1205 = vunpack.c.h.b16 %v1051
  %v1206 = vunpack.c.l.b16 %v1052
  %v1207 = vunpack.c.h.b16 %v1052
  %v1208 = vunpack.c.l.b16 %v1053
  %v1209 = vunpack.c.h.b16 %v1053
  %v1210 = vunpack.c.l.b16 %v1054
  %v1211 = vunpack.c.h.b16 %v1054
  %v1212 = vunpack.c.l.b16 %v1055
  %v1213 = vunpack.c.h.b16 %v1055
  %v1214 = vunpack.c.l.b16 %v1056
  %v1215 = vunpack.c.h.b16 %v1056
  %v1216 = vunpack.c.l.b16 %v1057
  %v1217 = vunpack.c.h.b16 %v1057
  %v1218 = vunpack.c.l.b16 %v1058
  %v1219 = vunpack.c.h.b16 %v1058
  %v1220 = vunpack.c.l.b16 %v1059
  %v1221 = vunpack.c.h.b16 %v1059
  %v1222 = vunpack.c.l.b16 %v1060
  %v1223 = vunpack.c.h.b16 %v1060
  %v1224 = vunpack.c.l.b16 %v1061
  %v1225 = vunpack.c.h.b16 %v1061
  %v1226 = vunpack.c.l.b16 %v1062
  %v1227 = vunpack.c.h.b16 %v1062
  %v1228 = vunpack.c.l.b16 %v1063
  %v1229 = vunpack.c.h.b16 %v1063
  %v1230 = vunpack.c.l.b16 %v1064
  %v1231 = vunpack.c.h.b16 %v1064
  %v1232 = vunpack.c.l.b16 %v1065
  %v1233 = vunpack.c.h.b16 %v1065
  %v1234 = vpack.c.b16 %v1140, %v1138
  %v1235 = vpack.c.b16 %v1141, %v1139
  %v1236 = vpack.c.b16 %v1144, %v1142
  %v1237 = vpack.c.b16 %v1145, %v1143
  %v1238 = vpack.c.b16 %v1148, %v1146
  %v1239 = vpack.c.b16 %v1149, %v1147
  %v1240 = vpack.c.b16 %v1152, %v1150
  %v1241 = vpack.c.b16 %v1153, %v1151
  %v1242 = vpack.c.b16 %v1156, %v1154
  %v1243 = vpack.c.b16 %v1157, %v1155
  %v1244 = vpack.c.b16 %v1160, %v1158
  %v1245 = vpack.c.b16 %v1161, %v1159
  %v1246 = vpack.c.b16 %v1164, %v1162
  %v1247 = vpack.c.b16 %v1165, %v1163
  %v1248 = vpack.c.b16 %v1168, %v1166
  %v1249 = vpack.c.b16 %v1169, %v1167
  %v1250 = vpack.c.b16 %v1172, %v1170
  %v1251 = vpack.c.b16 %v1173, %v1171
  %v1252 = vpack.c.b16 %v1176, %v1174
  %v1253 = vpack.c.b16 %v1177, %v1175
  %v1254 = vpack.c.b16 %v1180, %v1178
  %v1255 = vpack.c.b16 %v1181, %v1179
  %v1256 = vpack.c.b16 %v1184, %v1182
  %v1257 = vpack.c.b16 %v1185, %v1183
  %v1258 = vpack.c.b16 %v1188, %v1186
  %v1259 = vpack.c.b16 %v1189, %v1187
  %v1260 = vpack.c.b16 %v1192, %v1190
  %v1261 = vpack.c.b16 %v1193, %v1191
  %v1262 = vpack.c.b16 %v1196, %v1194
  %v1263 = vpack.c.b16 %v1197, %v1195
  %v1264 = vpack.c.b16 %v1200, %v1198
  %v1265 = vpack.c.b16 %v1201, %v1199
  %v1266 = vpack.c.b16 %v1204, %v1202
  %v1267 = vpack.c.b16 %v1205, %v1203
  %v1268 = vpack.c.b16 %v1208, %v1206
  %v1269 = vpack.c.b16 %v1209, %v1207
  %v1270 = vpack.c.b16 %v1212, %v1210
  %v1271 = vpack.c.b16 %v1213, %v1211
  %v1272 = vpack.c.b16 %v1216, %v1214
  %v1273 = vpack.c.b16 %v1217, %v1215
  %v1274 = vpack.c.b16 %v1220, %v1218
  %v1275 = vpack.c.b16 %v1221, %v1219
  %v1276 = vpack.c.b16 %v1224, %v1222
  %v1277 = vpack.c.b16 %v1225, %v1223
  %v1278 = vpack.c.b16 %v1228, %v1226
  %v1279 = vpack.c.b16 %v1229, %v1227
  %v1280 = vpack.c.b16 %v1232, %v1230
  %v1281 = vpack.c.b16 %v1233, %v1231
  %1330 = vmatprep.subr.bf16.mxu0 %v1235
  %1331 = vmatpush1.bf16.msra.mxu0 %v1234
  %1332 = vmatprep.subr.bf16.mxu0 %v1237
  %1333 = vmatpush1.bf16.msra.mxu0 %v1236
  %1334 = vmatprep.subr.bf16.mxu0 %v1239
  %1335 = vmatpush1.bf16.msra.mxu0 %v1238
  %1336 = vmatprep.subr.bf16.mxu0 %v1241
  %1337 = vmatpush1.bf16.msra.mxu0 %v1240
  %1338 = vmatprep.subr.bf16.mxu0 %v1243
  %1339 = vmatpush1.bf16.msra.mxu0 %v1242
  %1340 = vmatprep.subr.bf16.mxu0 %v1245
  %1341 = vmatpush1.bf16.msra.mxu0 %v1244
  %1342 = vmatprep.subr.bf16.mxu0 %v1247
  %1343 = vmatpush1.bf16.msra.mxu0 %v1246
  %1344 = vmatprep.subr.bf16.mxu0 %v1249
  %1345 = vmatpush1.bf16.msra.mxu0 %v1248
  %1346 = vmatprep.subr.bf16.mxu0 %v1251
  %1347 = vmatpush1.bf16.msra.mxu0 %v1250
  %1348 = vmatprep.subr.bf16.mxu0 %v1253
  %1349 = vmatpush1.bf16.msra.mxu0 %v1252
  %1350 = vmatprep.subr.bf16.mxu0 %v1255
  %1351 = vmatpush1.bf16.msra.mxu0 %v1254
  %1352 = vmatprep.subr.bf16.mxu0 %v1257
  %1353 = vmatpush1.bf16.msra.mxu0 %v1256
  %1354 = vmatprep.subr.bf16.mxu0 %v1259
  %1355 = vmatpush1.bf16.msra.mxu0 %v1258
  %1356 = vmatprep.subr.bf16.mxu0 %v1261
  %1357 = vmatpush1.bf16.msra.mxu0 %v1260
  %1358 = vmatprep.subr.bf16.mxu0 %v1263
  %1359 = vmatpush1.bf16.msra.mxu0 %v1262
  %1360 = vmatprep.subr.bf16.mxu0 %v1265
  %1361 = vmatpush1.bf16.msra.mxu0 %v1264
  %1362 = vmatprep.mubr.bf16.mxu0 %v1079
  %1363 = vmatmul.mubr.bf16.gmra.mrb[0].mxu0 %v1078
  %v1364 = vpop.f32.mrb[0].mxu0
  %v1365 = vadd.f32 0.0, %v1364
  %v1366 = vpop.f32.mrb[0].mxu0
  %v1367 = vadd.f32 0.0, %v1366
  %v1368 = vpop.f32.mrb[0].mxu0
  %v1369 = vadd.f32 0.0, %v1368
  %v1370 = vpop.f32.mrb[0].mxu0
  %v1371 = vadd.f32 0.0, %v1370
  %1372 = vmatprep.mubr.bf16.mxu0 %v1082
  %1373 = vmatmul.mubr.bf16.gmra.mrb[0].mxu0 %v1081
  %v1374 = vpop.f32.mrb[0].mxu0
  %v1375 = vadd.f32 0.0, %v1374
  %v1376 = vpop.f32.mrb[0].mxu0
  %v1377 = vadd.f32 0.0, %v1376
  %v1378 = vpop.f32.mrb[0].mxu0
  %v1379 = vadd.f32 0.0, %v1378
  %v1380 = vpop.f32.mrb[0].mxu0
  %v1381 = vadd.f32 0.0, %v1380
  %1382 = vdwg.mxu0
  %1383 = vmatprep.subr.bf16.mxu0 %v1267
  %1384 = vmatpush1.bf16.msra.mxu0 %v1266
  %1385 = vmatprep.subr.bf16.mxu0 %v1269
  %1386 = vmatpush1.bf16.msra.mxu0 %v1268
  %1387 = vmatprep.subr.bf16.mxu0 %v1271
  %1388 = vmatpush1.bf16.msra.mxu0 %v1270
  %1389 = vmatprep.subr.bf16.mxu0 %v1273
  %1390 = vmatpush1.bf16.msra.mxu0 %v1272
  %1391 = vmatprep.subr.bf16.mxu0 %v1275
  %1392 = vmatpush1.bf16.msra.mxu0 %v1274
  %1393 = vmatprep.subr.bf16.mxu0 %v1277
  %1394 = vmatpush1.bf16.msra.mxu0 %v1276
  %1395 = vmatprep.subr.bf16.mxu0 %v1279
  %1396 = vmatpush1.bf16.msra.mxu0 %v1278
  %1397 = vmatprep.subr.bf16.mxu0 %v1281
  %1398 = vmatpush1.bf16.msra.mxu0 %v1280
  %1399 = vmatprep.subr.bf16.mxu0 0
  %1400 = vmatpush1.bf16.msra.mxu0 0
  %1401 = vmatprep.subr.bf16.mxu0 0
  %1402 = vmatpush1.bf16.msra.mxu0 0
  %1403 = vmatprep.subr.bf16.mxu0 0
  %1404 = vmatpush1.bf16.msra.mxu0 0
  %1405 = vmatprep.subr.bf16.mxu0 0
  %1406 = vmatpush1.bf16.msra.mxu0 0
  %1407 = vmatprep.subr.bf16.mxu0 0
  %1408 = vmatpush1.bf16.msra.mxu0 0
  %1409 = vmatprep.subr.bf16.mxu0 0
  %1410 = vmatpush1.bf16.msra.mxu0 0
  %1411 = vmatprep.subr.bf16.mxu0 0
  %1412 = vmatpush1.bf16.msra.mxu0 0
  %1413 = vmatprep.subr.bf16.mxu0 0
  %1414 = vmatpush1.bf16.msra.mxu0 0
  %1415 = vmatprep.mubr.bf16.mxu0 0
  %1416 = vmatmul.mubr.bf16.gmra.mrb[0].mxu0 %v1080
  %v1417 = vpop.f32.mrb[0].mxu0
  %v1418 = vadd.f32 %v1365, %v1417
  %v1419 = vpop.f32.mrb[0].mxu0
  %v1420 = vadd.f32 %v1367, %v1419
  %v1421 = vpop.f32.mrb[0].mxu0
  %v1422 = vadd.f32 %v1369, %v1421
  %v1423 = vpop.f32.mrb[0].mxu0
  %v1424 = vadd.f32 %v1371, %v1423
  %1425 = vmatprep.mubr.bf16.mxu0 0
  %1426 = vmatmul.mubr.bf16.gmra.mrb[0].mxu0 %v1083
  %v1427 = vpop.f32.mrb[0].mxu0
  %v1428 = vadd.f32 %v1375, %v1427
  %v1429 = vpop.f32.mrb[0].mxu0
  %v1430 = vadd.f32 %v1377, %v1429
  %v1431 = vpop.f32.mrb[0].mxu0
  %v1432 = vadd.f32 %v1379, %v1431
  %v1433 = vpop.f32.mrb[0].mxu0
  %v1434 = vadd.f32 %v1381, %v1433
  %1435 = vdwg.mxu0
  %v1436 = vadd.f32 %v956, %v1418
  %v1437 = vadd.f32 %v958, %v1420
  %v1438 = vadd.f32 %v960, %v1422
  %v1439 = vadd.f32 %v962, %v1424
  %v1440 = vadd.f32 %v966, %v1428
  %v1441 = vadd.f32 %v968, %v1430
  %v1442 = vadd.f32 %v970, %v1432
  %v1443 = vadd.f32 %v972, %v1434
  %v1444 = vadd.f32 %v1436, %v1438
  %v1445 = vadd.f32 %v1444, %v1440
  %v1446 = vadd.f32 %v1445, %v1442
  %v1447 = vrot.slane %v1446, 4
  %v1448 = vadd.f32 %v1446, %v1447
  %v1449 = vrot.slane %v1448, 2
  %v1450 = vadd.f32 %v1448, %v1449
  %v1451 = vrot.slane %v1450, 1
  %v1452 = vadd.f32 %v1450, %v1451
  %v1453 = vadd.f32 %v1437, %v1439
  %v1454 = vadd.f32 %v1453, %v1441
  %v1455 = vadd.f32 %v1454, %v1443
  %v1456 = vrot.slane %v1455, 4
  %v1457 = vadd.f32 %v1455, %v1456
  %v1458 = vrot.slane %v1457, 2
  %v1459 = vadd.f32 %v1457, %v1458
  %v1460 = vrot.slane %v1459, 1
  %v1461 = vadd.f32 %v1459, %v1460
  %v1462 = vmul.f32 %v1436, %v1436
  %v1463 = vmul.f32 %v1437, %v1437
  %v1464 = vmul.f32 %v1438, %v1438
  %v1465 = vmul.f32 %v1439, %v1439
  %v1466 = vmul.f32 %v1440, %v1440
  %v1467 = vmul.f32 %v1441, %v1441
  %v1468 = vmul.f32 %v1442, %v1442
  %v1469 = vmul.f32 %v1443, %v1443
  %v1470 = vadd.f32 %v1462, %v1464
  %v1471 = vadd.f32 %v1470, %v1466
  %v1472 = vadd.f32 %v1471, %v1468
  %v1473 = vrot.slane %v1472, 4
  %v1474 = vadd.f32 %v1472, %v1473
  %v1475 = vrot.slane %v1474, 2
  %v1476 = vadd.f32 %v1474, %v1475
  %v1477 = vrot.slane %v1476, 1
  %v1478 = vadd.f32 %v1476, %v1477
  %v1479 = vadd.f32 %v1463, %v1465
  %v1480 = vadd.f32 %v1479, %v1467
  %v1481 = vadd.f32 %v1480, %v1469
  %v1482 = vrot.slane %v1481, 4
  %v1483 = vadd.f32 %v1481, %v1482
  %v1484 = vrot.slane %v1483, 2
  %v1485 = vadd.f32 %v1483, %v1484
  %v1486 = vrot.slane %v1485, 1
  %v1487 = vadd.f32 %v1485, %v1486
  %vm1488 = vcmask 1040384
  %v1489 = vsel %vm1488, %v1452, %v1478
  %v1490 = vsel %vm1488, %v1461, %v1487
  %v1491 = vlaneseq
  %v1492 = vshrl.u32 %v1491, 7
  %v1493 = vadd.s32 %v1492, 8
  %v1494 = vadd.s32 %v1492, 16
  %v1495 = vadd.s32 %v1492, 24
  %v1496 = vadd.s32 %v1492, 32
  %v1497 = vadd.s32 %v1492, 40
  %v1498 = vadd.s32 %v1492, 48
  %v1499 = vadd.s32 %v1492, 56
  %v1500 = vadd.s32 %v1492, 64
  %v1501 = vadd.s32 %v1492, 72
  %v1502 = vadd.s32 %v1492, 80
  %v1503 = vadd.s32 %v1492, 88
  %v1504 = vadd.s32 %v1492, 96
  %v1505 = vadd.s32 %v1492, 104
  %v1506 = vadd.s32 %v1492, 112
  %v1507 = vadd.s32 %v1492, 120
  %v1508 = vadd.s32 %v1492, 128
  %v1509 = vadd.s32 %v1492, 136
  %v1510 = vadd.s32 %v1492, 144
  %v1511 = vadd.s32 %v1492, 152
  %v1512 = vadd.s32 %v1492, 160
  %v1513 = vadd.s32 %v1492, 168
  %v1514 = vadd.s32 %v1492, 176
  %v1515 = vadd.s32 %v1492, 184
  %v1516 = vadd.s32 %v1492, 192
  %v1517 = vadd.s32 %v1492, 200
  %v1518 = vadd.s32 %v1492, 208
  %v1519 = vadd.s32 %v1492, 216
  %v1520 = vadd.s32 %v1492, 224
  %v1521 = vadd.s32 %v1492, 232
  %v1522 = vadd.s32 %v1492, 240
  %v1523 = vadd.s32 %v1492, 248
  %vm1524 = vcmp.lt.s32.totalorder %v1492, 0
  %v1525 = vsub.s32 0, %v1492
  %v1526 = vsel %vm1524, %v1525, %v1492
  %v1527 = vshrl.u32 %v1526, 4
  %v1528 = vand.u32 %v1526, 15
  %v1529 = vsub.s32 0, %v1528
  %v1530 = vsel %vm1524, %v1529, %v1528
  %vm1531 = vcmp.lt.s32.totalorder %v1493, 0
  %v1532 = vsub.s32 0, %v1493
  %v1533 = vsel %vm1531, %v1532, %v1493
  %v1534 = vshrl.u32 %v1533, 4
  %v1535 = vand.u32 %v1533, 15
  %v1536 = vsub.s32 0, %v1535
  %v1537 = vsel %vm1531, %v1536, %v1535
  %vm1538 = vcmp.lt.s32.totalorder %v1494, 0
  %v1539 = vsub.s32 0, %v1494
  %v1540 = vsel %vm1538, %v1539, %v1494
  %v1541 = vshrl.u32 %v1540, 4
  %v1542 = vand.u32 %v1540, 15
  %v1543 = vsub.s32 0, %v1542
  %v1544 = vsel %vm1538, %v1543, %v1542
  %vm1545 = vcmp.lt.s32.totalorder %v1495, 0
  %v1546 = vsub.s32 0, %v1495
  %v1547 = vsel %vm1545, %v1546, %v1495
  %v1548 = vshrl.u32 %v1547, 4
  %v1549 = vand.u32 %v1547, 15
  %v1550 = vsub.s32 0, %v1549
  %v1551 = vsel %vm1545, %v1550, %v1549
  %vm1552 = vcmp.lt.s32.totalorder %v1496, 0
  %v1553 = vsub.s32 0, %v1496
  %v1554 = vsel %vm1552, %v1553, %v1496
  %v1555 = vshrl.u32 %v1554, 4
  %v1556 = vand.u32 %v1554, 15
  %v1557 = vsub.s32 0, %v1556
  %v1558 = vsel %vm1552, %v1557, %v1556
  %vm1559 = vcmp.lt.s32.totalorder %v1497, 0
  %v1560 = vsub.s32 0, %v1497
  %v1561 = vsel %vm1559, %v1560, %v1497
  %v1562 = vshrl.u32 %v1561, 4
  %v1563 = vand.u32 %v1561, 15
  %v1564 = vsub.s32 0, %v1563
  %v1565 = vsel %vm1559, %v1564, %v1563
  %vm1566 = vcmp.lt.s32.totalorder %v1498, 0
  %v1567 = vsub.s32 0, %v1498
  %v1568 = vsel %vm1566, %v1567, %v1498
  %v1569 = vshrl.u32 %v1568, 4
  %v1570 = vand.u32 %v1568, 15
  %v1571 = vsub.s32 0, %v1570
  %v1572 = vsel %vm1566, %v1571, %v1570
  %vm1573 = vcmp.lt.s32.totalorder %v1499, 0
  %v1574 = vsub.s32 0, %v1499
  %v1575 = vsel %vm1573, %v1574, %v1499
  %v1576 = vshrl.u32 %v1575, 4
  %v1577 = vand.u32 %v1575, 15
  %v1578 = vsub.s32 0, %v1577
  %v1579 = vsel %vm1573, %v1578, %v1577
  %vm1580 = vcmp.lt.s32.totalorder %v1500, 0
  %v1581 = vsub.s32 0, %v1500
  %v1582 = vsel %vm1580, %v1581, %v1500
  %v1583 = vshrl.u32 %v1582, 4
  %v1584 = vand.u32 %v1582, 15
  %v1585 = vsub.s32 0, %v1584
  %v1586 = vsel %vm1580, %v1585, %v1584
  %vm1587 = vcmp.lt.s32.totalorder %v1501, 0
  %v1588 = vsub.s32 0, %v1501
  %v1589 = vsel %vm1587, %v1588, %v1501
  %v1590 = vshrl.u32 %v1589, 4
  %v1591 = vand.u32 %v1589, 15
  %v1592 = vsub.s32 0, %v1591
  %v1593 = vsel %vm1587, %v1592, %v1591
  %vm1594 = vcmp.lt.s32.totalorder %v1502, 0
  %v1595 = vsub.s32 0, %v1502
  %v1596 = vsel %vm1594, %v1595, %v1502
  %v1597 = vshrl.u32 %v1596, 4
  %v1598 = vand.u32 %v1596, 15
  %v1599 = vsub.s32 0, %v1598
  %v1600 = vsel %vm1594, %v1599, %v1598
  %vm1601 = vcmp.lt.s32.totalorder %v1503, 0
  %v1602 = vsub.s32 0, %v1503
  %v1603 = vsel %vm1601, %v1602, %v1503
  %v1604 = vshrl.u32 %v1603, 4
  %v1605 = vand.u32 %v1603, 15
  %v1606 = vsub.s32 0, %v1605
  %v1607 = vsel %vm1601, %v1606, %v1605
  %vm1608 = vcmp.lt.s32.totalorder %v1504, 0
  %v1609 = vsub.s32 0, %v1504
  %v1610 = vsel %vm1608, %v1609, %v1504
  %v1611 = vshrl.u32 %v1610, 4
  %v1612 = vand.u32 %v1610, 15
  %v1613 = vsub.s32 0, %v1612
  %v1614 = vsel %vm1608, %v1613, %v1612
  %vm1615 = vcmp.lt.s32.totalorder %v1505, 0
  %v1616 = vsub.s32 0, %v1505
  %v1617 = vsel %vm1615, %v1616, %v1505
  %v1618 = vshrl.u32 %v1617, 4
  %v1619 = vand.u32 %v1617, 15
  %v1620 = vsub.s32 0, %v1619
  %v1621 = vsel %vm1615, %v1620, %v1619
  %vm1622 = vcmp.lt.s32.totalorder %v1506, 0
  %v1623 = vsub.s32 0, %v1506
  %v1624 = vsel %vm1622, %v1623, %v1506
  %v1625 = vshrl.u32 %v1624, 4
  %v1626 = vand.u32 %v1624, 15
  %v1627 = vsub.s32 0, %v1626
  %v1628 = vsel %vm1622, %v1627, %v1626
  %vm1629 = vcmp.lt.s32.totalorder %v1507, 0
  %v1630 = vsub.s32 0, %v1507
  %v1631 = vsel %vm1629, %v1630, %v1507
  %v1632 = vshrl.u32 %v1631, 4
  %v1633 = vand.u32 %v1631, 15
  %v1634 = vsub.s32 0, %v1633
  %v1635 = vsel %vm1629, %v1634, %v1633
  %vm1636 = vcmp.lt.s32.totalorder %v1508, 0
  %v1637 = vsub.s32 0, %v1508
  %v1638 = vsel %vm1636, %v1637, %v1508
  %v1639 = vshrl.u32 %v1638, 4
  %v1640 = vand.u32 %v1638, 15
  %v1641 = vsub.s32 0, %v1640
  %v1642 = vsel %vm1636, %v1641, %v1640
  %vm1643 = vcmp.lt.s32.totalorder %v1509, 0
  %v1644 = vsub.s32 0, %v1509
  %v1645 = vsel %vm1643, %v1644, %v1509
  %v1646 = vshrl.u32 %v1645, 4
  %v1647 = vand.u32 %v1645, 15
  %v1648 = vsub.s32 0, %v1647
  %v1649 = vsel %vm1643, %v1648, %v1647
  %vm1650 = vcmp.lt.s32.totalorder %v1510, 0
  %v1651 = vsub.s32 0, %v1510
  %v1652 = vsel %vm1650, %v1651, %v1510
  %v1653 = vshrl.u32 %v1652, 4
  %v1654 = vand.u32 %v1652, 15
  %v1655 = vsub.s32 0, %v1654
  %v1656 = vsel %vm1650, %v1655, %v1654
  %vm1657 = vcmp.lt.s32.totalorder %v1511, 0
  %v1658 = vsub.s32 0, %v1511
  %v1659 = vsel %vm1657, %v1658, %v1511
  %v1660 = vshrl.u32 %v1659, 4
  %v1661 = vand.u32 %v1659, 15
  %v1662 = vsub.s32 0, %v1661
  %v1663 = vsel %vm1657, %v1662, %v1661
  %vm1664 = vcmp.lt.s32.totalorder %v1512, 0
  %v1665 = vsub.s32 0, %v1512
  %v1666 = vsel %vm1664, %v1665, %v1512
  %v1667 = vshrl.u32 %v1666, 4
  %v1668 = vand.u32 %v1666, 15
  %v1669 = vsub.s32 0, %v1668
  %v1670 = vsel %vm1664, %v1669, %v1668
  %vm1671 = vcmp.lt.s32.totalorder %v1513, 0
  %v1672 = vsub.s32 0, %v1513
  %v1673 = vsel %vm1671, %v1672, %v1513
  %v1674 = vshrl.u32 %v1673, 4
  %v1675 = vand.u32 %v1673, 15
  %v1676 = vsub.s32 0, %v1675
  %v1677 = vsel %vm1671, %v1676, %v1675
  %vm1678 = vcmp.lt.s32.totalorder %v1514, 0
  %v1679 = vsub.s32 0, %v1514
  %v1680 = vsel %vm1678, %v1679, %v1514
  %v1681 = vshrl.u32 %v1680, 4
  %v1682 = vand.u32 %v1680, 15
  %v1683 = vsub.s32 0, %v1682
  %v1684 = vsel %vm1678, %v1683, %v1682
  %vm1685 = vcmp.lt.s32.totalorder %v1515, 0
  %v1686 = vsub.s32 0, %v1515
  %v1687 = vsel %vm1685, %v1686, %v1515
  %v1688 = vshrl.u32 %v1687, 4
  %v1689 = vand.u32 %v1687, 15
  %v1690 = vsub.s32 0, %v1689
  %v1691 = vsel %vm1685, %v1690, %v1689
  %vm1692 = vcmp.lt.s32.totalorder %v1516, 0
  %v1693 = vsub.s32 0, %v1516
  %v1694 = vsel %vm1692, %v1693, %v1516
  %v1695 = vshrl.u32 %v1694, 4
  %v1696 = vand.u32 %v1694, 15
  %v1697 = vsub.s32 0, %v1696
  %v1698 = vsel %vm1692, %v1697, %v1696
  %vm1699 = vcmp.lt.s32.totalorder %v1517, 0
  %v1700 = vsub.s32 0, %v1517
  %v1701 = vsel %vm1699, %v1700, %v1517
  %v1702 = vshrl.u32 %v1701, 4
  %v1703 = vand.u32 %v1701, 15
  %v1704 = vsub.s32 0, %v1703
  %v1705 = vsel %vm1699, %v1704, %v1703
  %vm1706 = vcmp.lt.s32.totalorder %v1518, 0
  %v1707 = vsub.s32 0, %v1518
  %v1708 = vsel %vm1706, %v1707, %v1518
  %v1709 = vshrl.u32 %v1708, 4
  %v1710 = vand.u32 %v1708, 15
  %v1711 = vsub.s32 0, %v1710
  %v1712 = vsel %vm1706, %v1711, %v1710
  %vm1713 = vcmp.lt.s32.totalorder %v1519, 0
  %v1714 = vsub.s32 0, %v1519
  %v1715 = vsel %vm1713, %v1714, %v1519
  %v1716 = vshrl.u32 %v1715, 4
  %v1717 = vand.u32 %v1715, 15
  %v1718 = vsub.s32 0, %v1717
  %v1719 = vsel %vm1713, %v1718, %v1717
  %vm1720 = vcmp.lt.s32.totalorder %v1520, 0
  %v1721 = vsub.s32 0, %v1520
  %v1722 = vsel %vm1720, %v1721, %v1520
  %v1723 = vshrl.u32 %v1722, 4
  %v1724 = vand.u32 %v1722, 15
  %v1725 = vsub.s32 0, %v1724
  %v1726 = vsel %vm1720, %v1725, %v1724
  %vm1727 = vcmp.lt.s32.totalorder %v1521, 0
  %v1728 = vsub.s32 0, %v1521
  %v1729 = vsel %vm1727, %v1728, %v1521
  %v1730 = vshrl.u32 %v1729, 4
  %v1731 = vand.u32 %v1729, 15
  %v1732 = vsub.s32 0, %v1731
  %v1733 = vsel %vm1727, %v1732, %v1731
  %vm1734 = vcmp.lt.s32.totalorder %v1522, 0
  %v1735 = vsub.s32 0, %v1522
  %v1736 = vsel %vm1734, %v1735, %v1522
  %v1737 = vshrl.u32 %v1736, 4
  %v1738 = vand.u32 %v1736, 15
  %v1739 = vsub.s32 0, %v1738
  %v1740 = vsel %vm1734, %v1739, %v1738
  %vm1741 = vcmp.lt.s32.totalorder %v1523, 0
  %v1742 = vsub.s32 0, %v1523
  %v1743 = vsel %vm1741, %v1742, %v1523
  %v1744 = vshrl.u32 %v1743, 4
  %v1745 = vand.u32 %v1743, 15
  %v1746 = vsub.s32 0, %v1745
  %v1747 = vsel %vm1741, %v1746, %v1745
  %vm1748 = vcmp.ne.s32.totalorder %v1530, 0
  %vm1749 = vcmp.ne.s32.totalorder %v1537, 0
  %vm1750 = vcmp.ne.s32.totalorder %v1544, 0
  %vm1751 = vcmp.ne.s32.totalorder %v1551, 0
  %vm1752 = vcmp.ne.s32.totalorder %v1558, 0
  %vm1753 = vcmp.ne.s32.totalorder %v1565, 0
  %vm1754 = vcmp.ne.s32.totalorder %v1572, 0
  %vm1755 = vcmp.ne.s32.totalorder %v1579, 0
  %vm1756 = vcmp.ne.s32.totalorder %v1586, 0
  %vm1757 = vcmp.ne.s32.totalorder %v1593, 0
  %vm1758 = vcmp.ne.s32.totalorder %v1600, 0
  %vm1759 = vcmp.ne.s32.totalorder %v1607, 0
  %vm1760 = vcmp.ne.s32.totalorder %v1614, 0
  %vm1761 = vcmp.ne.s32.totalorder %v1621, 0
  %vm1762 = vcmp.ne.s32.totalorder %v1628, 0
  %vm1763 = vcmp.ne.s32.totalorder %v1635, 0
  %vm1764 = vcmp.ne.s32.totalorder %v1642, 0
  %vm1765 = vcmp.ne.s32.totalorder %v1649, 0
  %vm1766 = vcmp.ne.s32.totalorder %v1656, 0
  %vm1767 = vcmp.ne.s32.totalorder %v1663, 0
  %vm1768 = vcmp.ne.s32.totalorder %v1670, 0
  %vm1769 = vcmp.ne.s32.totalorder %v1677, 0
  %vm1770 = vcmp.ne.s32.totalorder %v1684, 0
  %vm1771 = vcmp.ne.s32.totalorder %v1691, 0
  %vm1772 = vcmp.ne.s32.totalorder %v1698, 0
  %vm1773 = vcmp.ne.s32.totalorder %v1705, 0
  %vm1774 = vcmp.ne.s32.totalorder %v1712, 0
  %vm1775 = vcmp.ne.s32.totalorder %v1719, 0
  %vm1776 = vcmp.ne.s32.totalorder %v1726, 0
  %vm1777 = vcmp.ne.s32.totalorder %v1733, 0
  %vm1778 = vcmp.ne.s32.totalorder %v1740, 0
  %vm1779 = vcmp.ne.s32.totalorder %v1747, 0
  %vm1780 = vcmp.lt.s32.totalorder %v1530, 0
  %vm1781 = vcmp.lt.s32.totalorder %v1537, 0
  %vm1782 = vcmp.lt.s32.totalorder %v1544, 0
  %vm1783 = vcmp.lt.s32.totalorder %v1551, 0
  %vm1784 = vcmp.lt.s32.totalorder %v1558, 0
  %vm1785 = vcmp.lt.s32.totalorder %v1565, 0
  %vm1786 = vcmp.lt.s32.totalorder %v1572, 0
  %vm1787 = vcmp.lt.s32.totalorder %v1579, 0
  %vm1788 = vcmp.lt.s32.totalorder %v1586, 0
  %vm1789 = vcmp.lt.s32.totalorder %v1593, 0
  %vm1790 = vcmp.lt.s32.totalorder %v1600, 0
  %vm1791 = vcmp.lt.s32.totalorder %v1607, 0
  %vm1792 = vcmp.lt.s32.totalorder %v1614, 0
  %vm1793 = vcmp.lt.s32.totalorder %v1621, 0
  %vm1794 = vcmp.lt.s32.totalorder %v1628, 0
  %vm1795 = vcmp.lt.s32.totalorder %v1635, 0
  %vm1796 = vcmp.lt.s32.totalorder %v1642, 0
  %vm1797 = vcmp.lt.s32.totalorder %v1649, 0
  %vm1798 = vcmp.lt.s32.totalorder %v1656, 0
  %vm1799 = vcmp.lt.s32.totalorder %v1663, 0
  %vm1800 = vcmp.lt.s32.totalorder %v1670, 0
  %vm1801 = vcmp.lt.s32.totalorder %v1677, 0
  %vm1802 = vcmp.lt.s32.totalorder %v1684, 0
  %vm1803 = vcmp.lt.s32.totalorder %v1691, 0
  %vm1804 = vcmp.lt.s32.totalorder %v1698, 0
  %vm1805 = vcmp.lt.s32.totalorder %v1705, 0
  %vm1806 = vcmp.lt.s32.totalorder %v1712, 0
  %vm1807 = vcmp.lt.s32.totalorder %v1719, 0
  %vm1808 = vcmp.lt.s32.totalorder %v1726, 0
  %vm1809 = vcmp.lt.s32.totalorder %v1733, 0
  %vm1810 = vcmp.lt.s32.totalorder %v1740, 0
  %vm1811 = vcmp.lt.s32.totalorder %v1747, 0
  %vm1812 = vmand %vm1780, %vm1748
  %vm1813 = vmand %vm1781, %vm1749
  %vm1814 = vmand %vm1782, %vm1750
  %vm1815 = vmand %vm1783, %vm1751
  %vm1816 = vmand %vm1784, %vm1752
  %vm1817 = vmand %vm1785, %vm1753
  %vm1818 = vmand %vm1786, %vm1754
  %vm1819 = vmand %vm1787, %vm1755
  %vm1820 = vmand %vm1788, %vm1756
  %vm1821 = vmand %vm1789, %vm1757
  %vm1822 = vmand %vm1790, %vm1758
  %vm1823 = vmand %vm1791, %vm1759
  %vm1824 = vmand %vm1792, %vm1760
  %vm1825 = vmand %vm1793, %vm1761
  %vm1826 = vmand %vm1794, %vm1762
  %vm1827 = vmand %vm1795, %vm1763
  %vm1828 = vmand %vm1796, %vm1764
  %vm1829 = vmand %vm1797, %vm1765
  %vm1830 = vmand %vm1798, %vm1766
  %vm1831 = vmand %vm1799, %vm1767
  %vm1832 = vmand %vm1800, %vm1768
  %vm1833 = vmand %vm1801, %vm1769
  %vm1834 = vmand %vm1802, %vm1770
  %vm1835 = vmand %vm1803, %vm1771
  %vm1836 = vmand %vm1804, %vm1772
  %vm1837 = vmand %vm1805, %vm1773
  %vm1838 = vmand %vm1806, %vm1774
  %vm1839 = vmand %vm1807, %vm1775
  %vm1840 = vmand %vm1808, %vm1776
  %vm1841 = vmand %vm1809, %vm1777
  %vm1842 = vmand %vm1810, %vm1778
  %vm1843 = vmand %vm1811, %vm1779
  %v1844 = vadd.s32 %v1530, 16
  %v1845 = vadd.s32 %v1537, 16
  %v1846 = vadd.s32 %v1544, 16
  %v1847 = vadd.s32 %v1551, 16
  %v1848 = vadd.s32 %v1558, 16
  %v1849 = vadd.s32 %v1565, 16
  %v1850 = vadd.s32 %v1572, 16
  %v1851 = vadd.s32 %v1579, 16
  %v1852 = vadd.s32 %v1586, 16
  %v1853 = vadd.s32 %v1593, 16
  %v1854 = vadd.s32 %v1600, 16
  %v1855 = vadd.s32 %v1607, 16
  %v1856 = vadd.s32 %v1614, 16
  %v1857 = vadd.s32 %v1621, 16
  %v1858 = vadd.s32 %v1628, 16
  %v1859 = vadd.s32 %v1635, 16
  %v1860 = vadd.s32 %v1642, 16
  %v1861 = vadd.s32 %v1649, 16
  %v1862 = vadd.s32 %v1656, 16
  %v1863 = vadd.s32 %v1663, 16
  %v1864 = vadd.s32 %v1670, 16
  %v1865 = vadd.s32 %v1677, 16
  %v1866 = vadd.s32 %v1684, 16
  %v1867 = vadd.s32 %v1691, 16
  %v1868 = vadd.s32 %v1698, 16
  %v1869 = vadd.s32 %v1705, 16
  %v1870 = vadd.s32 %v1712, 16
  %v1871 = vadd.s32 %v1719, 16
  %v1872 = vadd.s32 %v1726, 16
  %v1873 = vadd.s32 %v1733, 16
  %v1874 = vadd.s32 %v1740, 16
  %v1875 = vadd.s32 %v1747, 16
  %v1876 = vsel %vm1812, %v1844, %v1530
  %v1877 = vsel %vm1813, %v1845, %v1537
  %v1878 = vsel %vm1814, %v1846, %v1544
  %v1879 = vsel %vm1815, %v1847, %v1551
  %v1880 = vsel %vm1816, %v1848, %v1558
  %v1881 = vsel %vm1817, %v1849, %v1565
  %v1882 = vsel %vm1818, %v1850, %v1572
  %v1883 = vsel %vm1819, %v1851, %v1579
  %v1884 = vsel %vm1820, %v1852, %v1586
  %v1885 = vsel %vm1821, %v1853, %v1593
  %v1886 = vsel %vm1822, %v1854, %v1600
  %v1887 = vsel %vm1823, %v1855, %v1607
  %v1888 = vsel %vm1824, %v1856, %v1614
  %v1889 = vsel %vm1825, %v1857, %v1621
  %v1890 = vsel %vm1826, %v1858, %v1628
  %v1891 = vsel %vm1827, %v1859, %v1635
  %v1892 = vsel %vm1828, %v1860, %v1642
  %v1893 = vsel %vm1829, %v1861, %v1649
  %v1894 = vsel %vm1830, %v1862, %v1656
  %v1895 = vsel %vm1831, %v1863, %v1663
  %v1896 = vsel %vm1832, %v1864, %v1670
  %v1897 = vsel %vm1833, %v1865, %v1677
  %v1898 = vsel %vm1834, %v1866, %v1684
  %v1899 = vsel %vm1835, %v1867, %v1691
  %v1900 = vsel %vm1836, %v1868, %v1698
  %v1901 = vsel %vm1837, %v1869, %v1705
  %v1902 = vsel %vm1838, %v1870, %v1712
  %v1903 = vsel %vm1839, %v1871, %v1719
  %v1904 = vsel %vm1840, %v1872, %v1726
  %v1905 = vsel %vm1841, %v1873, %v1733
  %v1906 = vsel %vm1842, %v1874, %v1740
  %v1907 = vsel %vm1843, %v1875, %v1747
  %v1908 = vlaneseq
  %v1909 = vand.u32 %v1908, 127
  %vm1910 = vcmp.eq.s32.totalorder %v1876, %v1909
  %vm1911 = vcmp.eq.s32.totalorder %v1877, %v1909
  %vm1912 = vcmp.eq.s32.totalorder %v1878, %v1909
  %vm1913 = vcmp.eq.s32.totalorder %v1879, %v1909
  %vm1914 = vcmp.eq.s32.totalorder %v1880, %v1909
  %vm1915 = vcmp.eq.s32.totalorder %v1881, %v1909
  %vm1916 = vcmp.eq.s32.totalorder %v1882, %v1909
  %vm1917 = vcmp.eq.s32.totalorder %v1883, %v1909
  %vm1918 = vcmp.eq.s32.totalorder %v1884, %v1909
  %vm1919 = vcmp.eq.s32.totalorder %v1885, %v1909
  %vm1920 = vcmp.eq.s32.totalorder %v1886, %v1909
  %vm1921 = vcmp.eq.s32.totalorder %v1887, %v1909
  %vm1922 = vcmp.eq.s32.totalorder %v1888, %v1909
  %vm1923 = vcmp.eq.s32.totalorder %v1889, %v1909
  %vm1924 = vcmp.eq.s32.totalorder %v1890, %v1909
  %vm1925 = vcmp.eq.s32.totalorder %v1891, %v1909
  %vm1926 = vcmp.eq.s32.totalorder %v1892, %v1909
  %vm1927 = vcmp.eq.s32.totalorder %v1893, %v1909
  %vm1928 = vcmp.eq.s32.totalorder %v1894, %v1909
  %vm1929 = vcmp.eq.s32.totalorder %v1895, %v1909
  %vm1930 = vcmp.eq.s32.totalorder %v1896, %v1909
  %vm1931 = vcmp.eq.s32.totalorder %v1897, %v1909
  %vm1932 = vcmp.eq.s32.totalorder %v1898, %v1909
  %vm1933 = vcmp.eq.s32.totalorder %v1899, %v1909
  %vm1934 = vcmp.eq.s32.totalorder %v1900, %v1909
  %vm1935 = vcmp.eq.s32.totalorder %v1901, %v1909
  %vm1936 = vcmp.eq.s32.totalorder %v1902, %v1909
  %vm1937 = vcmp.eq.s32.totalorder %v1903, %v1909
  %vm1938 = vcmp.eq.s32.totalorder %v1904, %v1909
  %vm1939 = vcmp.eq.s32.totalorder %v1905, %v1909
  %vm1940 = vcmp.eq.s32.totalorder %v1906, %v1909
  %vm1941 = vcmp.eq.s32.totalorder %v1907, %v1909
  %v1942 = vsel %vm1910, 1, 0
  %v1943 = vsel %vm1911, 1, 0
  %v1944 = vsel %vm1912, 1, 0
  %v1945 = vsel %vm1913, 1, 0
  %v1946 = vsel %vm1914, 1, 0
  %v1947 = vsel %vm1915, 1, 0
  %v1948 = vsel %vm1916, 1, 0
  %v1949 = vsel %vm1917, 1, 0
  %v1950 = vsel %vm1918, 1, 0
  %v1951 = vsel %vm1919, 1, 0
  %v1952 = vsel %vm1920, 1, 0
  %v1953 = vsel %vm1921, 1, 0
  %v1954 = vsel %vm1922, 1, 0
  %v1955 = vsel %vm1923, 1, 0
  %v1956 = vsel %vm1924, 1, 0
  %v1957 = vsel %vm1925, 1, 0
  %v1958 = vsel %vm1926, 1, 0
  %v1959 = vsel %vm1927, 1, 0
  %v1960 = vsel %vm1928, 1, 0
  %v1961 = vsel %vm1929, 1, 0
  %v1962 = vsel %vm1930, 1, 0
  %v1963 = vsel %vm1931, 1, 0
  %v1964 = vsel %vm1932, 1, 0
  %v1965 = vsel %vm1933, 1, 0
  %v1966 = vsel %vm1934, 1, 0
  %v1967 = vsel %vm1935, 1, 0
  %v1968 = vsel %vm1936, 1, 0
  %v1969 = vsel %vm1937, 1, 0
  %v1970 = vsel %vm1938, 1, 0
  %v1971 = vsel %vm1939, 1, 0
  %v1972 = vsel %vm1940, 1, 0
  %v1973 = vsel %vm1941, 1, 0
  %v1974 = vcvt.s32.f32 %v1942
  %v1975 = vcvt.s32.f32 %v1943
  %v1976 = vcvt.s32.f32 %v1944
  %v1977 = vcvt.s32.f32 %v1945
  %v1978 = vcvt.s32.f32 %v1946
  %v1979 = vcvt.s32.f32 %v1947
  %v1980 = vcvt.s32.f32 %v1948
  %v1981 = vcvt.s32.f32 %v1949
  %v1982 = vcvt.s32.f32 %v1950
  %v1983 = vcvt.s32.f32 %v1951
  %v1984 = vcvt.s32.f32 %v1952
  %v1985 = vcvt.s32.f32 %v1953
  %v1986 = vcvt.s32.f32 %v1954
  %v1987 = vcvt.s32.f32 %v1955
  %v1988 = vcvt.s32.f32 %v1956
  %v1989 = vcvt.s32.f32 %v1957
  %v1990 = vcvt.s32.f32 %v1958
  %v1991 = vcvt.s32.f32 %v1959
  %v1992 = vcvt.s32.f32 %v1960
  %v1993 = vcvt.s32.f32 %v1961
  %v1994 = vcvt.s32.f32 %v1962
  %v1995 = vcvt.s32.f32 %v1963
  %v1996 = vcvt.s32.f32 %v1964
  %v1997 = vcvt.s32.f32 %v1965
  %v1998 = vcvt.s32.f32 %v1966
  %v1999 = vcvt.s32.f32 %v1967
  %v2000 = vcvt.s32.f32 %v1968
  %v2001 = vcvt.s32.f32 %v1969
  %v2002 = vcvt.s32.f32 %v1970
  %v2003 = vcvt.s32.f32 %v1971
  %v2004 = vcvt.s32.f32 %v1972
  %v2005 = vcvt.s32.f32 %v1973
  %2006 = vmatprep.subr.mxu0 0.0
  %2007 = vmatpush1.msra.mxu0 %v1974
  %2008 = vmatprep.subr.mxu0 0.0
  %2009 = vmatpush1.msra.mxu0 %v1975
  %2010 = vmatprep.subr.mxu0 0.0
  %2011 = vmatpush1.msra.mxu0 %v1976
  %2012 = vmatprep.subr.mxu0 0.0
  %2013 = vmatpush1.msra.mxu0 %v1977
  %2014 = vmatprep.subr.mxu0 0.0
  %2015 = vmatpush1.msra.mxu0 %v1978
  %2016 = vmatprep.subr.mxu0 0.0
  %2017 = vmatpush1.msra.mxu0 %v1979
  %2018 = vmatprep.subr.mxu0 0.0
  %2019 = vmatpush1.msra.mxu0 %v1980
  %2020 = vmatprep.subr.mxu0 0.0
  %2021 = vmatpush1.msra.mxu0 %v1981
  %2022 = vmatprep.subr.mxu0 0.0
  %2023 = vmatpush1.msra.mxu0 %v1982
  %2024 = vmatprep.subr.mxu0 0.0
  %2025 = vmatpush1.msra.mxu0 %v1983
  %2026 = vmatprep.subr.mxu0 0.0
  %2027 = vmatpush1.msra.mxu0 %v1984
  %2028 = vmatprep.subr.mxu0 0.0
  %2029 = vmatpush1.msra.mxu0 %v1985
  %2030 = vmatprep.subr.mxu0 0.0
  %2031 = vmatpush1.msra.mxu0 %v1986
  %2032 = vmatprep.subr.mxu0 0.0
  %2033 = vmatpush1.msra.mxu0 %v1987
  %2034 = vmatprep.subr.mxu0 0.0
  %2035 = vmatpush1.msra.mxu0 %v1988
  %2036 = vmatprep.subr.mxu0 0.0
  %2037 = vmatpush1.msra.mxu0 %v1989
  %2038 = vmatprep.subr.mxu0 0.0
  %2039 = vmatpush1.msra.mxu0 %v1990
  %2040 = vmatprep.subr.mxu0 0.0
  %2041 = vmatpush1.msra.mxu0 %v1991
  %2042 = vmatprep.subr.mxu0 0.0
  %2043 = vmatpush1.msra.mxu0 %v1992
  %2044 = vmatprep.subr.mxu0 0.0
  %2045 = vmatpush1.msra.mxu0 %v1993
  %2046 = vmatprep.subr.mxu0 0.0
  %2047 = vmatpush1.msra.mxu0 %v1994
  %2048 = vmatprep.subr.mxu0 0.0
  %2049 = vmatpush1.msra.mxu0 %v1995
  %2050 = vmatprep.subr.mxu0 0.0
  %2051 = vmatpush1.msra.mxu0 %v1996
  %2052 = vmatprep.subr.mxu0 0.0
  %2053 = vmatpush1.msra.mxu0 %v1997
  %2054 = vmatprep.subr.mxu0 0.0
  %2055 = vmatpush1.msra.mxu0 %v1998
  %2056 = vmatprep.subr.mxu0 0.0
  %2057 = vmatpush1.msra.mxu0 %v1999
  %2058 = vmatprep.subr.mxu0 0.0
  %2059 = vmatpush1.msra.mxu0 %v2000
  %2060 = vmatprep.subr.mxu0 0.0
  %2061 = vmatpush1.msra.mxu0 %v2001
  %2062 = vmatprep.subr.mxu0 0.0
  %2063 = vmatpush1.msra.mxu0 %v2002
  %2064 = vmatprep.subr.mxu0 0.0
  %2065 = vmatpush1.msra.mxu0 %v2003
  %2066 = vmatprep.subr.mxu0 0.0
  %2067 = vmatpush1.msra.mxu0 %v2004
  %2068 = vmatprep.subr.mxu0 0.0
  %2069 = vmatpush1.msra.mxu0 %v2005
  %2070 = vmatprep.mubr.f32.mxu0 %v1490
  %2071 = vmatmul.mubr.f32.gmra.mrb[0].mxu0 %v1489
  %v2072 = vpop.f32.mrb[0].mxu0
  %v2073 = vadd.f32 0.0, %v2072
  %v2074 = vpop.f32.mrb[0].mxu0
  %2075 = vdwg.mxu0
  %v2076 = vmul.f32 %v2073, 0.001953125
  %v2077 = vmul.f32 %v2076, %v2076
  %v2079 = vrot.slane %v2077, 7
  %v2081 = vsub.f32 %v2076, %v2079
  %v2082 = vmax.f32 %v2081, 0.0
  %v2083 = vld [vmem:[%s2] sm:$0x1]
  %v2084 = vadd.f32 %v2082, 1e-05
  %v2085 = vrsqrt.pop %v2084
  %v2088 = vunpack.c.l.s4 1966171168
  %v2089 = vunpack.c.0.s8 %v2088
  %v2090 = vlaneseq
  %v2091 = vshrl.u32 %v2090, 7
  %v2092 = vsub.s32 %v2089, %v2091
  %v2093 = vrot.slane %v2085, %v2092
  %v2094 = vcombine.high %v2093, %v2093
  %v2096 = vunpack.c.l.s4 1966171168
  %v2097 = vunpack.c.0.s8 %v2096
  %v2098 = vlaneseq
  %v2099 = vshrl.u32 %v2098, 7
  %v2100 = vsub.s32 %v2097, %v2099
  %v2101 = vrot.slane %v2094, %v2100
  %v2103 = vmul.f32 %v2083, %v2101
  %v2104 = vld [vmem:[%s3] sm:$0x1]
  %v2105 = vmul.f32 %v2076, %v2103
  %v2106 = vsub.f32 %v2104, %v2105
  %v2108 = vlaneseq
  %v2109 = vshrl.u32 %v2108, 7
  %v2110 = vsub.s32 0, %v2109
  %v2111 = vrot.slane %v2106, %v2110
  %v2113 = vsel %vm1488, %v2103, %v2111
  %v2114 = vadd.s32 %v1909, 128
  %vm2115 = vcmp.lt.s32.totalorder %v1909, 0
  %v2116 = vsub.s32 0, %v1909
  %v2117 = vsel %vm2115, %v2116, %v1909
  %v2118 = vshrl.u32 %v2117, 4
  %v2119 = vand.u32 %v2117, 15
  %v2120 = vsub.s32 0, %v2119
  %v2121 = vsel %vm2115, %v2120, %v2119
  %vm2122 = vcmp.lt.s32.totalorder %v2114, 0
  %v2123 = vsub.s32 0, %v2114
  %v2124 = vsel %vm2122, %v2123, %v2114
  %v2125 = vshrl.u32 %v2124, 4
  %v2126 = vand.u32 %v2124, 15
  %v2127 = vsub.s32 0, %v2126
  %v2128 = vsel %vm2122, %v2127, %v2126
  %vm2129 = vcmp.ne.s32.totalorder %v2121, 0
  %vm2130 = vcmp.ne.s32.totalorder %v2128, 0
  %vm2131 = vcmp.lt.s32.totalorder %v2121, 0
  %vm2132 = vcmp.lt.s32.totalorder %v2128, 0
  %vm2133 = vmand %vm2131, %vm2129
  %vm2134 = vmand %vm2132, %vm2130
  %v2135 = vadd.s32 %v2121, 16
  %v2136 = vadd.s32 %v2128, 16
  %v2137 = vsel %vm2133, %v2135, %v2121
  %v2138 = vsel %vm2134, %v2136, %v2128
  %vm2139 = vcmp.eq.s32.totalorder %v2137, %v1492
  %vm2140 = vcmp.eq.s32.totalorder %v2138, %v1492
  %vm2141 = vcmp.eq.s32.totalorder %v2137, %v1493
  %vm2142 = vcmp.eq.s32.totalorder %v2138, %v1493
  %v2143 = vsel %vm2139, 1, 0
  %v2144 = vsel %vm2140, 1, 0
  %v2145 = vsel %vm2141, 1, 0
  %v2146 = vsel %vm2142, 1, 0
  %v2147 = vcvt.s32.f32 %v2143
  %v2148 = vcvt.s32.f32 %v2144
  %v2149 = vcvt.s32.f32 %v2145
  %v2150 = vcvt.s32.f32 %v2146
  %vm2151 = vcmask 130048
  %v2153 = vsel %vm2151, %v2113, 0
  %2155 = vmatprep.subr.mxu0 %v2148
  %2156 = vmatpush1.msra.mxu0 %v2147
  %2157 = vmatprep.subr.mxu0 %v2150
  %2158 = vmatpush1.msra.mxu0 %v2149
  %2159 = vmatprep.subr.mxu0 0.0
  %2160 = vmatpush1.msra.mxu0 0.0
  %2161 = vmatprep.subr.mxu0 0.0
  %2162 = vmatpush1.msra.mxu0 0.0
  %2163 = vmatprep.subr.mxu0 0.0
  %2164 = vmatpush1.msra.mxu0 0.0
  %2165 = vmatprep.subr.mxu0 0.0
  %2166 = vmatpush1.msra.mxu0 0.0
  %2167 = vmatprep.subr.mxu0 0.0
  %2168 = vmatpush1.msra.mxu0 0.0
  %2169 = vmatprep.subr.mxu0 0.0
  %2170 = vmatpush1.msra.mxu0 0.0
  %2171 = vmatprep.subr.mxu0 0.0
  %2172 = vmatpush1.msra.mxu0 0.0
  %2173 = vmatprep.subr.mxu0 0.0
  %2174 = vmatpush1.msra.mxu0 0.0
  %2175 = vmatprep.subr.mxu0 0.0
  %2176 = vmatpush1.msra.mxu0 0.0
  %2177 = vmatprep.subr.mxu0 0.0
  %2178 = vmatpush1.msra.mxu0 0.0
  %2179 = vmatprep.subr.mxu0 0.0
  %2180 = vmatpush1.msra.mxu0 0.0
  %2181 = vmatprep.subr.mxu0 0.0
  %2182 = vmatpush1.msra.mxu0 0.0
  %2183 = vmatprep.subr.mxu0 0.0
  %2184 = vmatpush1.msra.mxu0 0.0
  %2185 = vmatprep.subr.mxu0 0.0
  %2186 = vmatpush1.msra.mxu0 0.0
  %2187 = vmatprep.subr.mxu0 0.0
  %2188 = vmatpush1.msra.mxu0 0.0
  %2189 = vmatprep.subr.mxu0 0.0
  %2190 = vmatpush1.msra.mxu0 0.0
  %2191 = vmatprep.subr.mxu0 0.0
  %2192 = vmatpush1.msra.mxu0 0.0
  %2193 = vmatprep.subr.mxu0 0.0
  %2194 = vmatpush1.msra.mxu0 0.0
  %2195 = vmatprep.subr.mxu0 0.0
  %2196 = vmatpush1.msra.mxu0 0.0
  %2197 = vmatprep.subr.mxu0 0.0
  %2198 = vmatpush1.msra.mxu0 0.0
  %2199 = vmatprep.subr.mxu0 0.0
  %2200 = vmatpush1.msra.mxu0 0.0
  %2201 = vmatprep.subr.mxu0 0.0
  %2202 = vmatpush1.msra.mxu0 0.0
  %2203 = vmatprep.subr.mxu0 0.0
  %2204 = vmatpush1.msra.mxu0 0.0
  %2205 = vmatprep.subr.mxu0 0.0
  %2206 = vmatpush1.msra.mxu0 0.0
  %2207 = vmatprep.subr.mxu0 0.0
  %2208 = vmatpush1.msra.mxu0 0.0
  %2209 = vmatprep.subr.mxu0 0.0
  %2210 = vmatpush1.msra.mxu0 0.0
  %2211 = vmatprep.subr.mxu0 0.0
  %2212 = vmatpush1.msra.mxu0 0.0
  %2213 = vmatprep.subr.mxu0 0.0
  %2214 = vmatpush1.msra.mxu0 0.0
  %2215 = vmatprep.subr.mxu0 0.0
  %2216 = vmatpush1.msra.mxu0 0.0
  %2217 = vmatprep.subr.mxu0 0.0
  %2218 = vmatpush1.msra.mxu0 0.0
  %2219 = vmatprep.mubr.f32.mxu0 0.0
  %2220 = vmatmul.mubr.f32.gmra.mrb[0].mxu0 %v2153
  %v2221 = vpop.f32.mrb[0].mxu0
  %v2222 = vadd.f32 0.0, %v2221
  %v2223 = vpop.f32.mrb[0].mxu0
  %v2224 = vadd.f32 0.0, %v2223
  %2225 = vdwg.mxu0
  %v2226 = vlaneseq
  %v2227 = vshrl.u32 %v2226, 7
  %v2228 = vsub.s32 0, %v2227
  %v2229 = vrot.slane %v2222, %v2228
  %v2230 = vlaneseq
  %v2231 = vshrl.u32 %v2230, 7
  %v2232 = vsub.s32 0, %v2231
  %v2233 = vrot.slane %v2224, %v2232
  %v2234 = vmul.f32 %v1436, %v2229
  %v2235 = vmul.f32 %v1437, %v2233
  %v2236 = vmul.f32 %v1438, %v2229
  %v2237 = vmul.f32 %v1439, %v2233
  %v2238 = vmul.f32 %v1440, %v2229
  %v2239 = vmul.f32 %v1441, %v2233
  %v2240 = vmul.f32 %v1442, %v2229
  %v2241 = vmul.f32 %v1443, %v2233
  %v2242 = vlaneseq
  %v2243 = vshrl.u32 %v2242, 7
  %v2244 = vsub.s32 1, %v2243
  %v2245 = vrot.slane %v2222, %v2244
  %v2246 = vlaneseq
  %v2247 = vshrl.u32 %v2246, 7
  %v2248 = vsub.s32 1, %v2247
  %v2249 = vrot.slane %v2224, %v2248
  %v2250 = vadd.f32 %v2234, %v2245
  %v2251 = vadd.f32 %v2235, %v2249
  %v2252 = vadd.f32 %v2236, %v2245
  %v2253 = vadd.f32 %v2237, %v2249
  %v2254 = vadd.f32 %v2238, %v2245
  %v2255 = vadd.f32 %v2239, %v2249
  %v2256 = vadd.f32 %v2240, %v2245
  %v2257 = vadd.f32 %v2241, %v2249
  %v2258 = vmax.f32 %v2250, 0.0
  %v2259 = vmax.f32 %v2251, 0.0
  %v2260 = vmax.f32 %v2252, 0.0
  %v2261 = vmax.f32 %v2253, 0.0
  %v2262 = vmax.f32 %v2254, 0.0
  %v2263 = vmax.f32 %v2255, 0.0
  %v2264 = vmax.f32 %v2256, 0.0
  %v2265 = vmax.f32 %v2257, 0.0
  %2266 = vst [vmem:[%s4] sm:$0xff] %v2258
  %2267 = vst [vmem:[%s4 + $0x8] sm:$0xff] %v2259
  %2268 = vst [vmem:[%s4 + $0x10] sm:$0xff] %v2260
  %2269 = vst [vmem:[%s4 + $0x18] sm:$0xff] %v2261
  %2270 = vst [vmem:[%s4 + $0x20] sm:$0xff] %v2262
  %2271 = vst [vmem:[%s4 + $0x28] sm:$0xff] %v2263
  %2272 = vst [vmem:[%s4 + $0x30] sm:$0xff] %v2264
  %2273 = vst [vmem:[%s4 + $0x38] sm:$0xff] %v2265
  // Predicated region
  $region18: #{residual_block_forward.1} parent=0 // pred_check
    _
  $region19: #{residual_block_forward.1} parent=0 // pred_check_branch
    %2275 = sbr.rel (0) target = $region21
  $region20: #{residual_block_forward.1} parent=0 // pred_region
    _
  $region21: #{residual_block_forward.1} parent=0 // pred_fallthru
    _
  // Predicated region
  $region22: #{residual_block_forward.1} parent=0 // pred_check
    _
  $region23: #{residual_block_forward.1} parent=0 // pred_check_branch
    %2277 = sbr.rel (0) target = $region25
  $region24: #{residual_block_forward.1} parent=0 // pred_region
    _
  $region25: #{residual_block_forward.1} parent=0 // pred_fallthru
    _

</llo_original>
